<compile_context>
chip_gen: v5e
topology: v5e:2x2
jax: 0.10.0
libtpu: 0.0.40
codegen_flags: <defaults>
</compile_context>

<pallas_src>
import functools

import jax
import jax.numpy as jnp
from jax import lax
from jax.experimental import pallas as pl
from jax.experimental.pallas import tpu as pltpu


def _fused_conv_bn_kernel(xp_ref, w_ref, g_ref, b_ref, o_ref, *,
                          B, Ho, Wo, KH, KW, stride, dilation, eps):
    """Fused Conv2d(bias=False) + BatchNorm2d (batch statistics).

    xp_ref: (B, Hp, Wp, Cin)   padded NHWC input, f32 (channels = lane dim)
    w_ref : (KH*KW, Cout, Cin) conv weights folded tap-major, bf16
    g_ref : (Cout, 1)          gamma, f32
    b_ref : (Cout, 1)          beta,  f32
    o_ref : (B, Cout, Ho*Wo)   output (lane-dense last dim)
    """
    Cin = xp_ref.shape[-1]
    Cout = o_ref.shape[1]
    M = B * Ho * Wo

    # ---- direct conv: one MXU matmul per (kh, kw) tap, contracting Cin ----
    acc = jnp.zeros((Cout, M), jnp.float32)
    for kh in range(KH):
        for kw in range(KW):
            h0 = kh * dilation
            w0 = kw * dilation
            if stride == 1:
                xs = xp_ref[:, h0:h0 + Ho, w0:w0 + Wo, :]       # (B, Ho, Wo, Cin)
            else:
                xs = xp_ref[:, pl.ds(h0, Ho, stride), pl.ds(w0, Wo, stride), :]
            # Collapse the major dims only (Cin stays in lanes) -> cheap reshape.
            xs = xs.reshape(M, Cin).astype(jnp.bfloat16)
            w_tap = w_ref[kh * KW + kw]                          # (Cout, Cin) bf16
            # (Cout, Cin) x (M, Cin), contracting Cin (A @ B^T form), f32 accum.
            acc = acc + lax.dot_general(
                w_tap, xs, (((1,), (1,)), ((), ())),
                preferred_element_type=jnp.float32)

    # ---- BatchNorm2d with batch statistics, single pass, all f32 ----
    inv_n = 1.0 / M
    s1 = jnp.sum(acc, axis=-1, keepdims=True)                    # (Cout, 1)
    s2 = jnp.sum(acc * acc, axis=-1, keepdims=True)
    mean = s1 * inv_n
    var = s2 * inv_n - mean * mean                               # biased, as in BN
    scale = lax.rsqrt(var + eps) * g_ref[...]                    # (Cout, 1)
    shift = b_ref[...] - mean * scale
    out = acc * scale + shift                                    # (Cout, M) f32

    # ---- emit in (B, Cout, Ho*Wo): per-batch lane-aligned slices ----
    HoWo = Ho * Wo
    for b in range(B):
        o_ref[b] = out[:, b * HoWo:(b + 1) * HoWo].astype(o_ref.dtype)


def d34_conv2d(x, weight, gamma, beta, *, stride=1, padding=0, dilation=1, eps=1e-5):
    """Forward of d34_Conv2d: BatchNorm2d(Conv2d(x, weight, bias=False)).

    x:      (B, C_in, H, W) NCHW float32
    weight: (C_out, C_in, KH, KW)
    gamma, beta: (C_out,) BatchNorm affine parameters.
    BatchNorm uses batch statistics (training-mode forward); no ReLU in forward.
    """
    B, Cin, H, W = x.shape
    Cout, Cin_w, KH, KW = weight.shape
    assert Cin == Cin_w

    Ho = (H + 2 * padding - dilation * (KH - 1) - 1) // stride + 1
    Wo = (W + 2 * padding - dilation * (KW - 1) - 1) // stride + 1
    Hp, Wp = H + 2 * padding, W + 2 * padding
    M = B * Ho * Wo

    # Layout plumbing only (no patch expansion): padded NHWC input and the conv
    # weight folded tap-major (KH*KW, Cout, Cin) in bf16 (MXU-native input dtype).
    xp = jnp.pad(jnp.transpose(x, (0, 2, 3, 1)),
                 ((0, 0), (padding, padding), (padding, padding), (0, 0)))
    w_taps = jnp.transpose(weight, (2, 3, 0, 1)).reshape(KH * KW, Cout, Cin)
    w_taps = w_taps.astype(jnp.bfloat16)

    # Everything stays VMEM-resident for one fused invocation at these sizes.
    # TODO(synk): for large B*Ho*Wo or channel counts, add an M-tiled grid with a
    # two-pass (sum/sumsq -> normalize) BatchNorm and a K-tiled GEMM accumulator.
    resident_bytes = xp.size * 4 + w_taps.size * 2 + 2 * Cout * M * 4
    assert resident_bytes < 8 * 1024 * 1024, "shape too large for fused single-block path"

    kernel = functools.partial(
        _fused_conv_bn_kernel, B=B, Ho=Ho, Wo=Wo, KH=KH, KW=KW,
        stride=stride, dilation=dilation, eps=eps)

    out_flat = pl.pallas_call(
        kernel,
        out_shape=jax.ShapeDtypeStruct((B, Cout, Ho * Wo), x.dtype),
        grid_spec=pl.GridSpec(
            grid=(1,),
            in_specs=[
                pl.BlockSpec((B, Hp, Wp, Cin), lambda i: (0, 0, 0, 0)),
                pl.BlockSpec((KH * KW, Cout, Cin), lambda i: (0, 0, 0)),
                pl.BlockSpec((Cout, 1), lambda i: (0, 0)),
                pl.BlockSpec((Cout, 1), lambda i: (0, 0)),
            ],
            out_specs=pl.BlockSpec((B, Cout, Ho * Wo), lambda i: (0, 0, 0)),
        ),
        compiler_params=pltpu.CompilerParams(
            dimension_semantics=("arbitrary",),
        ),
    )(xp.astype(jnp.float32), w_taps,
      gamma.reshape(Cout, 1).astype(jnp.float32),
      beta.reshape(Cout, 1).astype(jnp.float32))

    # Free reshape (no transpose): (B, Cout, Ho*Wo) -> (B, Cout, Ho, Wo).
    return out_flat.reshape(B, Cout, Ho, Wo)


if __name__ == "__main__":
    # d34_Conv2d(in_planes=4, out_planes=8, kernel_size=3, stride=1, padding=1)
    B, Cin, H, W = 2, 4, 16, 16
    Cout, ksize, stride, padding, dilation = 8, 3, 1, 1, 1
    eps = 1e-5

    key = jax.random.PRNGKey(0)
    kx, kw_key, kg, kb = jax.random.split(key, 4)
    x = jax.random.normal(kx, (B, Cin, H, W), dtype=jnp.float32)
    weight = jax.random.normal(kw_key, (Cout, Cin, ksize, ksize), dtype=jnp.float32)
    gamma = 1.0 + 0.1 * jax.random.normal(kg, (Cout,), dtype=jnp.float32)
    beta = 0.1 * jax.random.normal(kb, (Cout,), dtype=jnp.float32)

    out = jax.block_until_ready(
        d34_conv2d(x, weight, gamma, beta,
                   stride=stride, padding=padding, dilation=dilation, eps=eps))

    # ---- pure-JAX reference: conv (HIGHEST precision) + batch-stat BatchNorm ----
    ref_conv = lax.conv_general_dilated(
        x, weight,
        window_strides=(stride, stride),
        padding=[(padding, padding), (padding, padding)],
        rhs_dilation=(dilation, dilation),
        dimension_numbers=("NCHW", "OIHW", "NCHW"),
        precision=lax.Precision.HIGHEST,
    )
    mean = ref_conv.mean(axis=(0, 2, 3), keepdims=True)
    var = ref_conv.var(axis=(0, 2, 3), keepdims=True)          # biased, as in BN
    ref = (ref_conv - mean) * lax.rsqrt(var + eps) \
        * gamma.reshape(1, -1, 1, 1) + beta.reshape(1, -1, 1, 1)

    assert out.shape == ref.shape
    # Tolerance sized for bf16 MXU inputs with f32 accumulation.
    assert jnp.allclose(out, ref, atol=2e-2, rtol=2e-2), \
        float(jnp.max(jnp.abs(out - ref)))

    print("KERNEL_OK")
</pallas_src>

<mosaic_0001>
module attributes {stable_mosaic.version = 11 : i64} {
  func.func @_fused_conv_bn_kernel(%arg0: i32, %arg1: memref<2x18x18x4xf32, #tpu.memory_space<vmem>>, %arg2: memref<9x8x4xbf16, #tpu.memory_space<vmem>>, %arg3: memref<8x1xf32, #tpu.memory_space<vmem>>, %arg4: memref<8x1xf32, #tpu.memory_space<vmem>>, %arg5: memref<2x8x256xf32, #tpu.memory_space<vmem>>) attributes {dimension_semantics = [#tpu.dimension_semantics<arbitrary>], iteration_bounds = array<i64: 1>, scalar_prefetch = 0 : i64, scratch_operands = 0 : i64, tpu.core_type = #tpu.core_type<tc>, window_params = [{pipeline_mode = #tpu.pipeline_mode<synchronous>, transform_indices = @transform_0, window_bounds = array<i64: 2, 18, 18, 4>}, {pipeline_mode = #tpu.pipeline_mode<synchronous>, transform_indices = @transform_1, window_bounds = array<i64: 9, 8, 4>}, {pipeline_mode = #tpu.pipeline_mode<synchronous>, transform_indices = @transform_2, window_bounds = array<i64: 8, 1>}, {pipeline_mode = #tpu.pipeline_mode<synchronous>, transform_indices = @transform_3, window_bounds = array<i64: 8, 1>}, {pipeline_mode = #tpu.pipeline_mode<synchronous>, transform_indices = @transform_4, window_bounds = array<i64: 2, 8, 256>}]} {
    %cst = arith.constant 0.000000e+00 : f32
    %0 = vector.broadcast %cst : f32 to vector<8x512xf32>
    %c0 = arith.constant 0 : index
    %c0_0 = arith.constant 0 : index
    %c0_1 = arith.constant 0 : index
    %c0_2 = arith.constant 0 : index
    %1 = vector.load %arg1[%c0, %c0_0, %c0_1, %c0_2] : memref<2x18x18x4xf32, #tpu.memory_space<vmem>>, vector<2x16x16x4xf32>
    %2 = vector.shape_cast %1 : vector<2x16x16x4xf32> to vector<512x4xf32>
    %3 = arith.truncf %2 : vector<512x4xf32> to vector<512x4xbf16>
    %c0_3 = arith.constant 0 : index
    %c0_4 = arith.constant 0 : index
    %c0_5 = arith.constant 0 : index
    %4 = vector.load %arg2[%c0_3, %c0_4, %c0_5] : memref<9x8x4xbf16, #tpu.memory_space<vmem>>, vector<1x8x4xbf16>
    %5 = vector.shape_cast %4 : vector<1x8x4xbf16> to vector<8x4xbf16>
    %cst_6 = arith.constant dense<0.000000e+00> : vector<8x512xf32>
    %6 = tpu.matmul %5, %3, %cst_6 {dimension_numbers = #tpu.dot_dimension_numbers<[1], [1], [0], [0], [0, 0, 1, 0], [], []>} : vector<8x4xbf16>, vector<512x4xbf16>, vector<8x512xf32> -> vector<8x512xf32>
    %7 = arith.addf %0, %6 : vector<8x512xf32>
    %c0_7 = arith.constant 0 : index
    %c0_8 = arith.constant 0 : index
    %c1 = arith.constant 1 : index
    %c0_9 = arith.constant 0 : index
    %8 = vector.load %arg1[%c0_7, %c0_8, %c1, %c0_9] : memref<2x18x18x4xf32, #tpu.memory_space<vmem>>, vector<2x16x16x4xf32>
    %9 = vector.shape_cast %8 : vector<2x16x16x4xf32> to vector<512x4xf32>
    %10 = arith.truncf %9 : vector<512x4xf32> to vector<512x4xbf16>
    %c1_10 = arith.constant 1 : index
    %c0_11 = arith.constant 0 : index
    %c0_12 = arith.constant 0 : index
    %11 = vector.load %arg2[%c1_10, %c0_11, %c0_12] : memref<9x8x4xbf16, #tpu.memory_space<vmem>>, vector<1x8x4xbf16>
    %12 = vector.shape_cast %11 : vector<1x8x4xbf16> to vector<8x4xbf16>
    %cst_13 = arith.constant dense<0.000000e+00> : vector<8x512xf32>
    %13 = tpu.matmul %12, %10, %cst_13 {dimension_numbers = #tpu.dot_dimension_numbers<[1], [1], [0], [0], [0, 0, 1, 0], [], []>} : vector<8x4xbf16>, vector<512x4xbf16>, vector<8x512xf32> -> vector<8x512xf32>
    %14 = arith.addf %7, %13 : vector<8x512xf32>
    %c0_14 = arith.constant 0 : index
    %c0_15 = arith.constant 0 : index
    %c2 = arith.constant 2 : index
    %c0_16 = arith.constant 0 : index
    %15 = vector.load %arg1[%c0_14, %c0_15, %c2, %c0_16] : memref<2x18x18x4xf32, #tpu.memory_space<vmem>>, vector<2x16x16x4xf32>
    %16 = vector.shape_cast %15 : vector<2x16x16x4xf32> to vector<512x4xf32>
    %17 = arith.truncf %16 : vector<512x4xf32> to vector<512x4xbf16>
    %c2_17 = arith.constant 2 : index
    %c0_18 = arith.constant 0 : index
    %c0_19 = arith.constant 0 : index
    %18 = vector.load %arg2[%c2_17, %c0_18, %c0_19] : memref<9x8x4xbf16, #tpu.memory_space<vmem>>, vector<1x8x4xbf16>
    %19 = vector.shape_cast %18 : vector<1x8x4xbf16> to vector<8x4xbf16>
    %cst_20 = arith.constant dense<0.000000e+00> : vector<8x512xf32>
    %20 = tpu.matmul %19, %17, %cst_20 {dimension_numbers = #tpu.dot_dimension_numbers<[1], [1], [0], [0], [0, 0, 1, 0], [], []>} : vector<8x4xbf16>, vector<512x4xbf16>, vector<8x512xf32> -> vector<8x512xf32>
    %21 = arith.addf %14, %20 : vector<8x512xf32>
    %c0_21 = arith.constant 0 : index
    %c1_22 = arith.constant 1 : index
    %c0_23 = arith.constant 0 : index
    %c0_24 = arith.constant 0 : index
    %22 = vector.load %arg1[%c0_21, %c1_22, %c0_23, %c0_24] : memref<2x18x18x4xf32, #tpu.memory_space<vmem>>, vector<2x16x16x4xf32>
    %23 = vector.shape_cast %22 : vector<2x16x16x4xf32> to vector<512x4xf32>
    %24 = arith.truncf %23 : vector<512x4xf32> to vector<512x4xbf16>
    %c3 = arith.constant 3 : index
    %c0_25 = arith.constant 0 : index
    %c0_26 = arith.constant 0 : index
    %25 = vector.load %arg2[%c3, %c0_25, %c0_26] : memref<9x8x4xbf16, #tpu.memory_space<vmem>>, vector<1x8x4xbf16>
    %26 = vector.shape_cast %25 : vector<1x8x4xbf16> to vector<8x4xbf16>
    %cst_27 = arith.constant dense<0.000000e+00> : vector<8x512xf32>
    %27 = tpu.matmul %26, %24, %cst_27 {dimension_numbers = #tpu.dot_dimension_numbers<[1], [1], [0], [0], [0, 0, 1, 0], [], []>} : vector<8x4xbf16>, vector<512x4xbf16>, vector<8x512xf32> -> vector<8x512xf32>
    %28 = arith.addf %21, %27 : vector<8x512xf32>
    %c0_28 = arith.constant 0 : index
    %c1_29 = arith.constant 1 : index
    %c1_30 = arith.constant 1 : index
    %c0_31 = arith.constant 0 : index
    %29 = vector.load %arg1[%c0_28, %c1_29, %c1_30, %c0_31] : memref<2x18x18x4xf32, #tpu.memory_space<vmem>>, vector<2x16x16x4xf32>
    %30 = vector.shape_cast %29 : vector<2x16x16x4xf32> to vector<512x4xf32>
    %31 = arith.truncf %30 : vector<512x4xf32> to vector<512x4xbf16>
    %c4 = arith.constant 4 : index
    %c0_32 = arith.constant 0 : index
    %c0_33 = arith.constant 0 : index
    %32 = vector.load %arg2[%c4, %c0_32, %c0_33] : memref<9x8x4xbf16, #tpu.memory_space<vmem>>, vector<1x8x4xbf16>
    %33 = vector.shape_cast %32 : vector<1x8x4xbf16> to vector<8x4xbf16>
    %cst_34 = arith.constant dense<0.000000e+00> : vector<8x512xf32>
    %34 = tpu.matmul %33, %31, %cst_34 {dimension_numbers = #tpu.dot_dimension_numbers<[1], [1], [0], [0], [0, 0, 1, 0], [], []>} : vector<8x4xbf16>, vector<512x4xbf16>, vector<8x512xf32> -> vector<8x512xf32>
    %35 = arith.addf %28, %34 : vector<8x512xf32>
    %c0_35 = arith.constant 0 : index
    %c1_36 = arith.constant 1 : index
    %c2_37 = arith.constant 2 : index
    %c0_38 = arith.constant 0 : index
    %36 = vector.load %arg1[%c0_35, %c1_36, %c2_37, %c0_38] : memref<2x18x18x4xf32, #tpu.memory_space<vmem>>, vector<2x16x16x4xf32>
    %37 = vector.shape_cast %36 : vector<2x16x16x4xf32> to vector<512x4xf32>
    %38 = arith.truncf %37 : vector<512x4xf32> to vector<512x4xbf16>
    %c5 = arith.constant 5 : index
    %c0_39 = arith.constant 0 : index
    %c0_40 = arith.constant 0 : index
    %39 = vector.load %arg2[%c5, %c0_39, %c0_40] : memref<9x8x4xbf16, #tpu.memory_space<vmem>>, vector<1x8x4xbf16>
    %40 = vector.shape_cast %39 : vector<1x8x4xbf16> to vector<8x4xbf16>
    %cst_41 = arith.constant dense<0.000000e+00> : vector<8x512xf32>
    %41 = tpu.matmul %40, %38, %cst_41 {dimension_numbers = #tpu.dot_dimension_numbers<[1], [1], [0], [0], [0, 0, 1, 0], [], []>} : vector<8x4xbf16>, vector<512x4xbf16>, vector<8x512xf32> -> vector<8x512xf32>
    %42 = arith.addf %35, %41 : vector<8x512xf32>
    %c0_42 = arith.constant 0 : index
    %c2_43 = arith.constant 2 : index
    %c0_44 = arith.constant 0 : index
    %c0_45 = arith.constant 0 : index
    %43 = vector.load %arg1[%c0_42, %c2_43, %c0_44, %c0_45] : memref<2x18x18x4xf32, #tpu.memory_space<vmem>>, vector<2x16x16x4xf32>
    %44 = vector.shape_cast %43 : vector<2x16x16x4xf32> to vector<512x4xf32>
    %45 = arith.truncf %44 : vector<512x4xf32> to vector<512x4xbf16>
    %c6 = arith.constant 6 : index
    %c0_46 = arith.constant 0 : index
    %c0_47 = arith.constant 0 : index
    %46 = vector.load %arg2[%c6, %c0_46, %c0_47] : memref<9x8x4xbf16, #tpu.memory_space<vmem>>, vector<1x8x4xbf16>
    %47 = vector.shape_cast %46 : vector<1x8x4xbf16> to vector<8x4xbf16>
    %cst_48 = arith.constant dense<0.000000e+00> : vector<8x512xf32>
    %48 = tpu.matmul %47, %45, %cst_48 {dimension_numbers = #tpu.dot_dimension_numbers<[1], [1], [0], [0], [0, 0, 1, 0], [], []>} : vector<8x4xbf16>, vector<512x4xbf16>, vector<8x512xf32> -> vector<8x512xf32>
    %49 = arith.addf %42, %48 : vector<8x512xf32>
    %c0_49 = arith.constant 0 : index
    %c2_50 = arith.constant 2 : index
    %c1_51 = arith.constant 1 : index
    %c0_52 = arith.constant 0 : index
    %50 = vector.load %arg1[%c0_49, %c2_50, %c1_51, %c0_52] : memref<2x18x18x4xf32, #tpu.memory_space<vmem>>, vector<2x16x16x4xf32>
    %51 = vector.shape_cast %50 : vector<2x16x16x4xf32> to vector<512x4xf32>
    %52 = arith.truncf %51 : vector<512x4xf32> to vector<512x4xbf16>
    %c7 = arith.constant 7 : index
    %c0_53 = arith.constant 0 : index
    %c0_54 = arith.constant 0 : index
    %53 = vector.load %arg2[%c7, %c0_53, %c0_54] : memref<9x8x4xbf16, #tpu.memory_space<vmem>>, vector<1x8x4xbf16>
    %54 = vector.shape_cast %53 : vector<1x8x4xbf16> to vector<8x4xbf16>
    %cst_55 = arith.constant dense<0.000000e+00> : vector<8x512xf32>
    %55 = tpu.matmul %54, %52, %cst_55 {dimension_numbers = #tpu.dot_dimension_numbers<[1], [1], [0], [0], [0, 0, 1, 0], [], []>} : vector<8x4xbf16>, vector<512x4xbf16>, vector<8x512xf32> -> vector<8x512xf32>
    %56 = arith.addf %49, %55 : vector<8x512xf32>
    %c0_56 = arith.constant 0 : index
    %c2_57 = arith.constant 2 : index
    %c2_58 = arith.constant 2 : index
    %c0_59 = arith.constant 0 : index
    %57 = vector.load %arg1[%c0_56, %c2_57, %c2_58, %c0_59] : memref<2x18x18x4xf32, #tpu.memory_space<vmem>>, vector<2x16x16x4xf32>
    %58 = vector.shape_cast %57 : vector<2x16x16x4xf32> to vector<512x4xf32>
    %59 = arith.truncf %58 : vector<512x4xf32> to vector<512x4xbf16>
    %c8 = arith.constant 8 : index
    %c0_60 = arith.constant 0 : index
    %c0_61 = arith.constant 0 : index
    %60 = vector.load %arg2[%c8, %c0_60, %c0_61] : memref<9x8x4xbf16, #tpu.memory_space<vmem>>, vector<1x8x4xbf16>
    %61 = vector.shape_cast %60 : vector<1x8x4xbf16> to vector<8x4xbf16>
    %cst_62 = arith.constant dense<0.000000e+00> : vector<8x512xf32>
    %62 = tpu.matmul %61, %59, %cst_62 {dimension_numbers = #tpu.dot_dimension_numbers<[1], [1], [0], [0], [0, 0, 1, 0], [], []>} : vector<8x4xbf16>, vector<512x4xbf16>, vector<8x512xf32> -> vector<8x512xf32>
    %63 = arith.addf %56, %62 : vector<8x512xf32>
    %cst_63 = arith.constant dense<0.000000e+00> : vector<8xf32>
    %64 = vector.multi_reduction <add>, %63, %cst_63 [1] : vector<8x512xf32> to vector<8xf32>
    %65 = vector.shape_cast %64 : vector<8xf32> to vector<8x1xf32>
    %66 = arith.mulf %63, %63 : vector<8x512xf32>
    %cst_64 = arith.constant dense<0.000000e+00> : vector<8xf32>
    %67 = vector.multi_reduction <add>, %66, %cst_64 [1] : vector<8x512xf32> to vector<8xf32>
    %68 = vector.shape_cast %67 : vector<8xf32> to vector<8x1xf32>
    %cst_65 = arith.constant 0.001953125 : f32
    %69 = vector.broadcast %cst_65 : f32 to vector<8x1xf32>
    %70 = arith.mulf %65, %69 : vector<8x1xf32>
    %cst_66 = arith.constant 0.001953125 : f32
    %71 = vector.broadcast %cst_66 : f32 to vector<8x1xf32>
    %72 = arith.mulf %68, %71 : vector<8x1xf32>
    %73 = arith.mulf %70, %70 : vector<8x1xf32>
    %74 = arith.subf %72, %73 : vector<8x1xf32>
    %cst_67 = arith.constant 9.99999974E-6 : f32
    %75 = vector.broadcast %cst_67 : f32 to vector<8x1xf32>
    %76 = arith.addf %74, %75 : vector<8x1xf32>
    %77 = math.rsqrt %76 : vector<8x1xf32>
    %c0_68 = arith.constant 0 : index
    %c0_69 = arith.constant 0 : index
    %78 = vector.load %arg3[%c0_68, %c0_69] : memref<8x1xf32, #tpu.memory_space<vmem>>, vector<8x1xf32>
    %79 = arith.mulf %77, %78 : vector<8x1xf32>
    %c0_70 = arith.constant 0 : index
    %c0_71 = arith.constant 0 : index
    %80 = vector.load %arg4[%c0_70, %c0_71] : memref<8x1xf32, #tpu.memory_space<vmem>>, vector<8x1xf32>
    %81 = arith.mulf %70, %79 : vector<8x1xf32>
    %82 = arith.subf %80, %81 : vector<8x1xf32>
    %83 = vector.broadcast %79 : vector<8x1xf32> to vector<8x512xf32>
    %84 = arith.mulf %63, %83 : vector<8x512xf32>
    %85 = vector.broadcast %82 : vector<8x1xf32> to vector<8x512xf32>
    %86 = arith.addf %84, %85 : vector<8x512xf32>
    %87 = vector.extract_strided_slice %86 {offsets = [0, 0], sizes = [8, 256], strides = [1, 1]} : vector<8x512xf32> to vector<8x256xf32>
    %c0_72 = arith.constant 0 : index
    %c0_73 = arith.constant 0 : index
    %c0_74 = arith.constant 0 : index
    %88 = vector.load %arg5[%c0_72, %c0_73, %c0_74] : memref<2x8x256xf32, #tpu.memory_space<vmem>>, vector<1x8x256xf32>
    %89 = vector.shape_cast %88 : vector<1x8x256xf32> to vector<8x256xf32>
    %90 = vector.shape_cast %87 : vector<8x256xf32> to vector<1x8x256xf32>
    tpu.vector_store %arg5[%c0_72, %c0_73, %c0_74], %90 {strides = array<i32>} : memref<2x8x256xf32, #tpu.memory_space<vmem>>, vector<1x8x256xf32>,
    %91 = vector.extract_strided_slice %86 {offsets = [0, 256], sizes = [8, 256], strides = [1, 1]} : vector<8x512xf32> to vector<8x256xf32>
    %c1_75 = arith.constant 1 : index
    %c0_76 = arith.constant 0 : index
    %c0_77 = arith.constant 0 : index
    %92 = vector.load %arg5[%c1_75, %c0_76, %c0_77] : memref<2x8x256xf32, #tpu.memory_space<vmem>>, vector<1x8x256xf32>
    %93 = vector.shape_cast %92 : vector<1x8x256xf32> to vector<8x256xf32>
    %94 = vector.shape_cast %91 : vector<8x256xf32> to vector<1x8x256xf32>
    tpu.vector_store %arg5[%c1_75, %c0_76, %c0_77], %94 {strides = array<i32>} : memref<2x8x256xf32, #tpu.memory_space<vmem>>, vector<1x8x256xf32>,
    return
  }
  func.func @transform_0(%arg0: i32) -> (i32, i32, i32, i32) {
    %c0_i32 = arith.constant 0 : i32
    %c0_i32_0 = arith.constant 0 : i32
    %c0_i32_1 = arith.constant 0 : i32
    %c0_i32_2 = arith.constant 0 : i32
    %c0_i32_3 = arith.constant 0 : i32
    return %c0_i32, %c0_i32_0, %c0_i32_1, %c0_i32_2 : i32, i32, i32, i32
  }
  func.func @transform_1(%arg0: i32) -> (i32, i32, i32) {
    %c0_i32 = arith.constant 0 : i32
    %c0_i32_0 = arith.constant 0 : i32
    %c0_i32_1 = arith.constant 0 : i32
    %c0_i32_2 = arith.constant 0 : i32
    return %c0_i32, %c0_i32_0, %c0_i32_1 : i32, i32, i32
  }
  func.func @transform_2(%arg0: i32) -> (i32, i32) {
    %c0_i32 = arith.constant 0 : i32
    %c0_i32_0 = arith.constant 0 : i32
    %c0_i32_1 = arith.constant 0 : i32
    return %c0_i32, %c0_i32_0 : i32, i32
  }
  func.func @transform_3(%arg0: i32) -> (i32, i32) {
    %c0_i32 = arith.constant 0 : i32
    %c0_i32_0 = arith.constant 0 : i32
    %c0_i32_1 = arith.constant 0 : i32
    return %c0_i32, %c0_i32_0 : i32, i32
  }
  func.func @transform_4(%arg0: i32) -> (i32, i32, i32) {
    %c0_i32 = arith.constant 0 : i32
    %c0_i32_0 = arith.constant 0 : i32
    %c0_i32_1 = arith.constant 0 : i32
    %c0_i32_2 = arith.constant 0 : i32
    return %c0_i32, %c0_i32_0, %c0_i32_1 : i32, i32, i32
  }
}

</mosaic_0001>

<llo_original>
// kernel: tpu_custom_call.1
$region0: #{tpu_custom_call.1}
  #allocation0 [shape = 'u32[]', space=smem, size = 0x4, offset = 0x4, fixed_abs, tag = 'smem constant byte address 0x4 - core index']
  #allocation1 [shape = 'u32[72,128]{1,0:T(1,128)}', space=vmem, size = 0x9000, scoped, tag = 'internal scratch']
  %s0 = inlined_call_operand.vmem [shape: f32[2,18,18,4], index: 0, kind: input, shape index: {}]
  %s1 = inlined_call_operand.vmem [shape: bf16[9,8,4], index: 1, kind: input, shape index: {}]
  %s2 = inlined_call_operand.vmem [shape: f32[8,1], index: 2, kind: input, shape index: {}]
  %s3 = inlined_call_operand.vmem [shape: f32[8,1], index: 3, kind: input, shape index: {}]
  %s4 = inlined_call_operand.hbm [shape: f32[2,8,256], index: 4, kind: output, shape index: {}]
  %s5 = sld [smem:[#allocation0]]
  $region26: #{tpu_custom_call.1} parent=0
    _
  %s7 = ssub.s32 1, %s5
  %s8 = scalar_select 0, %s7, %s5
  $region1: #{tpu_custom_call.1} parent=0
    #allocation2 [shape = 'u8[16384]{0}', space=vmem, size = 0x4000, scoped, tag = 'output window, operand 0, single buffered']
    #allocation3 [shape = 's32[1]{0}', space=sflag, size = 0x4, scoped, tag = 'scoped memory for tpu_custom_call.1']
    %9 = vsyncpa [#allocation3], 0
    // Predicated region
    $region2: #{tpu_custom_call.1} parent=1 // pred_check
      _
    $region3: #{tpu_custom_call.1} parent=1 // pred_check_branch
      %11 = sbr.rel (0) target = $region5
    $region4: #{tpu_custom_call.1} parent=1 // pred_region
      _
    $region5: #{tpu_custom_call.1} parent=1 // pred_fallthru
      _
    // Predicated region
    $region6: #{tpu_custom_call.1} parent=1 // pred_check
      _
    $region7: #{tpu_custom_call.1} parent=1 // pred_check_branch
      %13 = sbr.rel (0) target = $region9
    $region8: #{tpu_custom_call.1} parent=1 // pred_region
      _
    $region9: #{tpu_custom_call.1} parent=1 // pred_fallthru
      _
    // Predicated region
    $region10: #{tpu_custom_call.1} parent=1 // pred_check
      _
    $region11: #{tpu_custom_call.1} parent=1 // pred_check_branch
      %15 = sbr.rel (0) target = $region13
    $region12: #{tpu_custom_call.1} parent=1 // pred_region
      _
    $region13: #{tpu_custom_call.1} parent=1 // pred_fallthru
      _
    // Predicated region
    $region14: #{tpu_custom_call.1} parent=1 // pred_check
      _
    $region15: #{tpu_custom_call.1} parent=1 // pred_check_branch
      %17 = sbr.rel (0) target = $region17
    $region16: #{tpu_custom_call.1} parent=1 // pred_region
      _
    $region17: #{tpu_custom_call.1} parent=1 // pred_fallthru
      _
    %v18 = vld [vmem:[%s0] sm:$0xff]
    %v19 = vld [vmem:[%s0 + $0x8] sm:$0xff]
    %v20 = vld [vmem:[%s0 + $0x18] sm:$0xff]
    %v21 = vld [vmem:[%s0 + $0x20] sm:$0xff]
    %v22 = vld [vmem:[%s0 + $0x30] sm:$0xff]
    %v23 = vld [vmem:[%s0 + $0x38] sm:$0xff]
    %v24 = vld [vmem:[%s0 + $0x48] sm:$0xff]
    %v25 = vld [vmem:[%s0 + $0x50] sm:$0xff]
    %v26 = vld [vmem:[%s0 + $0x60] sm:$0xff]
    %v27 = vld [vmem:[%s0 + $0x68] sm:$0xff]
    %v28 = vld [vmem:[%s0 + $0x78] sm:$0xff]
    %v29 = vld [vmem:[%s0 + $0x80] sm:$0xff]
    %v30 = vld [vmem:[%s0 + $0x90] sm:$0xff]
    %v31 = vld [vmem:[%s0 + $0x98] sm:$0xff]
    %v32 = vld [vmem:[%s0 + $0xa8] sm:$0xff]
    %v33 = vld [vmem:[%s0 + $0xb0] sm:$0xff]
    %v34 = vld [vmem:[%s0 + $0xc0] sm:$0xff]
    %v35 = vld [vmem:[%s0 + $0xc8] sm:$0xff]
    %v36 = vld [vmem:[%s0 + $0xd8] sm:$0xff]
    %v37 = vld [vmem:[%s0 + $0xe0] sm:$0xff]
    %v38 = vld [vmem:[%s0 + $0xf0] sm:$0xff]
    %v39 = vld [vmem:[%s0 + $0xf8] sm:$0xff]
    %v40 = vld [vmem:[%s0 + $0x108] sm:$0xff]
    %v41 = vld [vmem:[%s0 + $0x110] sm:$0xff]
    %v42 = vld [vmem:[%s0 + $0x120] sm:$0xff]
    %v43 = vld [vmem:[%s0 + $0x128] sm:$0xff]
    %v44 = vld [vmem:[%s0 + $0x138] sm:$0xff]
    %v45 = vld [vmem:[%s0 + $0x140] sm:$0xff]
    %v46 = vld [vmem:[%s0 + $0x150] sm:$0xff]
    %v47 = vld [vmem:[%s0 + $0x158] sm:$0xff]
    %v48 = vld [vmem:[%s0 + $0x168] sm:$0xff]
    %v49 = vld [vmem:[%s0 + $0x170] sm:$0xff]
    %v50 = vld [vmem:[%s0 + $0x1b0] sm:$0xff]
    %v51 = vld [vmem:[%s0 + $0x1b8] sm:$0xff]
    %v52 = vld [vmem:[%s0 + $0x1c8] sm:$0xff]
    %v53 = vld [vmem:[%s0 + $0x1d0] sm:$0xff]
    %v54 = vld [vmem:[%s0 + $0x1e0] sm:$0xff]
    %v55 = vld [vmem:[%s0 + $0x1e8] sm:$0xff]
    %v56 = vld [vmem:[%s0 + $0x1f8] sm:$0xff]
    %v57 = vld [vmem:[%s0 + $0x200] sm:$0xff]
    %v58 = vld [vmem:[%s0 + $0x210] sm:$0xff]
    %v59 = vld [vmem:[%s0 + $0x218] sm:$0xff]
    %v60 = vld [vmem:[%s0 + $0x228] sm:$0xff]
    %v61 = vld [vmem:[%s0 + $0x230] sm:$0xff]
    %v62 = vld [vmem:[%s0 + $0x240] sm:$0xff]
    %v63 = vld [vmem:[%s0 + $0x248] sm:$0xff]
    %v64 = vld [vmem:[%s0 + $0x258] sm:$0xff]
    %v65 = vld [vmem:[%s0 + $0x260] sm:$0xff]
    %v66 = vld [vmem:[%s0 + $0x270] sm:$0xff]
    %v67 = vld [vmem:[%s0 + $0x278] sm:$0xff]
    %v68 = vld [vmem:[%s0 + $0x288] sm:$0xff]
    %v69 = vld [vmem:[%s0 + $0x290] sm:$0xff]
    %v70 = vld [vmem:[%s0 + $0x2a0] sm:$0xff]
    %v71 = vld [vmem:[%s0 + $0x2a8] sm:$0xff]
    %v72 = vld [vmem:[%s0 + $0x2b8] sm:$0xff]
    %v73 = vld [vmem:[%s0 + $0x2c0] sm:$0xff]
    %v74 = vld [vmem:[%s0 + $0x2d0] sm:$0xff]
    %v75 = vld [vmem:[%s0 + $0x2d8] sm:$0xff]
    %v76 = vld [vmem:[%s0 + $0x2e8] sm:$0xff]
    %v77 = vld [vmem:[%s0 + $0x2f0] sm:$0xff]
    %v78 = vld [vmem:[%s0 + $0x300] sm:$0xff]
    %v79 = vld [vmem:[%s0 + $0x308] sm:$0xff]
    %v80 = vld [vmem:[%s0 + $0x318] sm:$0xff]
    %v81 = vld [vmem:[%s0 + $0x320] sm:$0xff]
    %v82 = vpack.c.bf16 %v19, %v18
    %v83 = vpack.c.bf16 %v21, %v20
    %v84 = vpack.c.bf16 %v23, %v22
    %v85 = vpack.c.bf16 %v25, %v24
    %v86 = vpack.c.bf16 %v27, %v26
    %v87 = vpack.c.bf16 %v29, %v28
    %v88 = vpack.c.bf16 %v31, %v30
    %v89 = vpack.c.bf16 %v33, %v32
    %v90 = vpack.c.bf16 %v35, %v34
    %v91 = vpack.c.bf16 %v37, %v36
    %v92 = vpack.c.bf16 %v39, %v38
    %v93 = vpack.c.bf16 %v41, %v40
    %v94 = vpack.c.bf16 %v43, %v42
    %v95 = vpack.c.bf16 %v45, %v44
    %v96 = vpack.c.bf16 %v47, %v46
    %v97 = vpack.c.bf16 %v49, %v48
    %v98 = vpack.c.bf16 %v51, %v50
    %v99 = vpack.c.bf16 %v53, %v52
    %v100 = vpack.c.bf16 %v55, %v54
    %v101 = vpack.c.bf16 %v57, %v56
    %v102 = vpack.c.bf16 %v59, %v58
    %v103 = vpack.c.bf16 %v61, %v60
    %v104 = vpack.c.bf16 %v63, %v62
    %v105 = vpack.c.bf16 %v65, %v64
    %v106 = vpack.c.bf16 %v67, %v66
    %v107 = vpack.c.bf16 %v69, %v68
    %v108 = vpack.c.bf16 %v71, %v70
    %v109 = vpack.c.bf16 %v73, %v72
    %v110 = vpack.c.bf16 %v75, %v74
    %v111 = vpack.c.bf16 %v77, %v76
    %v112 = vpack.c.bf16 %v79, %v78
    %v113 = vpack.c.bf16 %v81, %v80
    %v114 = vld [vmem:[%s1] sm:$0xf]
    %v115 = vld [vmem:[%s0 + $0x1] sm:$0xff]
    %v116 = vld [vmem:[%s0 + $0x9] sm:$0xff]
    %v117 = vld [vmem:[%s0 + $0x19] sm:$0xff]
    %v118 = vld [vmem:[%s0 + $0x21] sm:$0xff]
    %v119 = vld [vmem:[%s0 + $0x31] sm:$0xff]
    %v120 = vld [vmem:[%s0 + $0x39] sm:$0xff]
    %v121 = vld [vmem:[%s0 + $0x49] sm:$0xff]
    %v122 = vld [vmem:[%s0 + $0x51] sm:$0xff]
    %v123 = vld [vmem:[%s0 + $0x61] sm:$0xff]
    %v124 = vld [vmem:[%s0 + $0x69] sm:$0xff]
    %v125 = vld [vmem:[%s0 + $0x79] sm:$0xff]
    %v126 = vld [vmem:[%s0 + $0x81] sm:$0xff]
    %v127 = vld [vmem:[%s0 + $0x91] sm:$0xff]
    %v128 = vld [vmem:[%s0 + $0x99] sm:$0xff]
    %v129 = vld [vmem:[%s0 + $0xa9] sm:$0xff]
    %v130 = vld [vmem:[%s0 + $0xb1] sm:$0xff]
    %v131 = vld [vmem:[%s0 + $0xc1] sm:$0xff]
    %v132 = vld [vmem:[%s0 + $0xc9] sm:$0xff]
    %v133 = vld [vmem:[%s0 + $0xd9] sm:$0xff]
    %v134 = vld [vmem:[%s0 + $0xe1] sm:$0xff]
    %v135 = vld [vmem:[%s0 + $0xf1] sm:$0xff]
    %v136 = vld [vmem:[%s0 + $0xf9] sm:$0xff]
    %v137 = vld [vmem:[%s0 + $0x109] sm:$0xff]
    %v138 = vld [vmem:[%s0 + $0x111] sm:$0xff]
    %v139 = vld [vmem:[%s0 + $0x121] sm:$0xff]
    %v140 = vld [vmem:[%s0 + $0x129] sm:$0xff]
    %v141 = vld [vmem:[%s0 + $0x139] sm:$0xff]
    %v142 = vld [vmem:[%s0 + $0x141] sm:$0xff]
    %v143 = vld [vmem:[%s0 + $0x151] sm:$0xff]
    %v144 = vld [vmem:[%s0 + $0x159] sm:$0xff]
    %v145 = vld [vmem:[%s0 + $0x169] sm:$0xff]
    %v146 = vld [vmem:[%s0 + $0x171] sm:$0xff]
    %v147 = vld [vmem:[%s0 + $0x1b1] sm:$0xff]
    %v148 = vld [vmem:[%s0 + $0x1b9] sm:$0xff]
    %v149 = vld [vmem:[%s0 + $0x1c9] sm:$0xff]
    %v150 = vld [vmem:[%s0 + $0x1d1] sm:$0xff]
    %v151 = vld [vmem:[%s0 + $0x1e1] sm:$0xff]
    %v152 = vld [vmem:[%s0 + $0x1e9] sm:$0xff]
    %v153 = vld [vmem:[%s0 + $0x1f9] sm:$0xff]
    %v154 = vld [vmem:[%s0 + $0x201] sm:$0xff]
    %v155 = vld [vmem:[%s0 + $0x211] sm:$0xff]
    %v156 = vld [vmem:[%s0 + $0x219] sm:$0xff]
    %v157 = vld [vmem:[%s0 + $0x229] sm:$0xff]
    %v158 = vld [vmem:[%s0 + $0x231] sm:$0xff]
    %v159 = vld [vmem:[%s0 + $0x241] sm:$0xff]
    %v160 = vld [vmem:[%s0 + $0x249] sm:$0xff]
    %v161 = vld [vmem:[%s0 + $0x259] sm:$0xff]
    %v162 = vld [vmem:[%s0 + $0x261] sm:$0xff]
    %v163 = vld [vmem:[%s0 + $0x271] sm:$0xff]
    %v164 = vld [vmem:[%s0 + $0x279] sm:$0xff]
    %v165 = vld [vmem:[%s0 + $0x289] sm:$0xff]
    %v166 = vld [vmem:[%s0 + $0x291] sm:$0xff]
    %v167 = vld [vmem:[%s0 + $0x2a1] sm:$0xff]
    %v168 = vld [vmem:[%s0 + $0x2a9] sm:$0xff]
    %v169 = vld [vmem:[%s0 + $0x2b9] sm:$0xff]
    %v170 = vld [vmem:[%s0 + $0x2c1] sm:$0xff]
    %v171 = vld [vmem:[%s0 + $0x2d1] sm:$0xff]
    %v172 = vld [vmem:[%s0 + $0x2d9] sm:$0xff]
    %v173 = vld [vmem:[%s0 + $0x2e9] sm:$0xff]
    %v174 = vld [vmem:[%s0 + $0x2f1] sm:$0xff]
    %v175 = vld [vmem:[%s0 + $0x301] sm:$0xff]
    %v176 = vld [vmem:[%s0 + $0x309] sm:$0xff]
    %v177 = vld [vmem:[%s0 + $0x319] sm:$0xff]
    %v178 = vld [vmem:[%s0 + $0x321] sm:$0xff]
    %v179 = vpack.c.bf16 %v116, %v115
    %v180 = vpack.c.bf16 %v118, %v117
    %v181 = vpack.c.bf16 %v120, %v119
    %v182 = vpack.c.bf16 %v122, %v121
    %v183 = vpack.c.bf16 %v124, %v123
    %v184 = vpack.c.bf16 %v126, %v125
    %v185 = vpack.c.bf16 %v128, %v127
    %v186 = vpack.c.bf16 %v130, %v129
    %v187 = vpack.c.bf16 %v132, %v131
    %v188 = vpack.c.bf16 %v134, %v133
    %v189 = vpack.c.bf16 %v136, %v135
    %v190 = vpack.c.bf16 %v138, %v137
    %v191 = vpack.c.bf16 %v140, %v139
    %v192 = vpack.c.bf16 %v142, %v141
    %v193 = vpack.c.bf16 %v144, %v143
    %v194 = vpack.c.bf16 %v146, %v145
    %v195 = vpack.c.bf16 %v148, %v147
    %v196 = vpack.c.bf16 %v150, %v149
    %v197 = vpack.c.bf16 %v152, %v151
    %v198 = vpack.c.bf16 %v154, %v153
    %v199 = vpack.c.bf16 %v156, %v155
    %v200 = vpack.c.bf16 %v158, %v157
    %v201 = vpack.c.bf16 %v160, %v159
    %v202 = vpack.c.bf16 %v162, %v161
    %v203 = vpack.c.bf16 %v164, %v163
    %v204 = vpack.c.bf16 %v166, %v165
    %v205 = vpack.c.bf16 %v168, %v167
    %v206 = vpack.c.bf16 %v170, %v169
    %v207 = vpack.c.bf16 %v172, %v171
    %v208 = vpack.c.bf16 %v174, %v173
    %v209 = vpack.c.bf16 %v176, %v175
    %v210 = vpack.c.bf16 %v178, %v177
    %s211 = scalar_lea.vmem %s1, 4
    %v212 = vld [vmem:[%s211] sm:$0xf]
    %vm213 = vcmask 31744
    %v215 = vsel %vm213, %v212, 0
    %v218 = vsel %vm213, %v179, 0
    %v221 = vsel %vm213, %v180, 0
    %v224 = vsel %vm213, %v181, 0
    %v227 = vsel %vm213, %v182, 0
    %v230 = vsel %vm213, %v183, 0
    %v233 = vsel %vm213, %v184, 0
    %v236 = vsel %vm213, %v185, 0
    %v239 = vsel %vm213, %v186, 0
    %v242 = vsel %vm213, %v187, 0
    %v245 = vsel %vm213, %v188, 0
    %v248 = vsel %vm213, %v189, 0
    %v251 = vsel %vm213, %v190, 0
    %v254 = vsel %vm213, %v191, 0
    %v257 = vsel %vm213, %v192, 0
    %v260 = vsel %vm213, %v193, 0
    %v263 = vsel %vm213, %v194, 0
    %v266 = vsel %vm213, %v195, 0
    %v269 = vsel %vm213, %v196, 0
    %v272 = vsel %vm213, %v197, 0
    %v275 = vsel %vm213, %v198, 0
    %v278 = vsel %vm213, %v199, 0
    %v281 = vsel %vm213, %v200, 0
    %v284 = vsel %vm213, %v201, 0
    %v287 = vsel %vm213, %v202, 0
    %v290 = vsel %vm213, %v203, 0
    %v293 = vsel %vm213, %v204, 0
    %v296 = vsel %vm213, %v205, 0
    %v299 = vsel %vm213, %v206, 0
    %v302 = vsel %vm213, %v207, 0
    %v305 = vsel %vm213, %v208, 0
    %v308 = vsel %vm213, %v209, 0
    %v311 = vsel %vm213, %v210, 0
    %313 = vmatpush.bf16.xpose.msra.mxu0 %v239
    %314 = vmatpush.bf16.xpose.msra.mxu0 %v236
    %315 = vmatpush.bf16.xpose.msra.mxu0 %v233
    %316 = vmatpush.bf16.xpose.msra.mxu0 %v230
    %317 = vmatpush.bf16.xpose.msra.mxu0 %v227
    %318 = vmatpush.bf16.xpose.msra.mxu0 %v224
    %319 = vmatpush.bf16.xpose.msra.mxu0 %v221
    %320 = vmatpush.bf16.xpose.msra.mxu0 %v218
    %321 = vmatmul.bf16.gmra.mxu0 %v215
    %v322 = vpop.f32.mrf.mxu0
    %v323 = vadd.f32 0.0, %v322
    %v324 = vpop.f32.mrf.mxu0
    %325 = vdwg.mxu0
    %326 = vmatpush.bf16.xpose.msra.mxu0 %v263
    %327 = vmatpush.bf16.xpose.msra.mxu0 %v260
    %328 = vmatpush.bf16.xpose.msra.mxu0 %v257
    %329 = vmatpush.bf16.xpose.msra.mxu0 %v254
    %330 = vmatpush.bf16.xpose.msra.mxu0 %v251
    %331 = vmatpush.bf16.xpose.msra.mxu0 %v248
    %332 = vmatpush.bf16.xpose.msra.mxu0 %v245
    %333 = vmatpush.bf16.xpose.msra.mxu0 %v242
    %334 = vmatmul.bf16.gmra.mxu0 %v215
    %v335 = vpop.f32.mrf.mxu0
    %v336 = vadd.f32 0.0, %v335
    %v337 = vpop.f32.mrf.mxu0
    %338 = vdwg.mxu0
    %339 = vmatpush.bf16.xpose.msra.mxu0 %v287
    %340 = vmatpush.bf16.xpose.msra.mxu0 %v284
    %341 = vmatpush.bf16.xpose.msra.mxu0 %v281
    %342 = vmatpush.bf16.xpose.msra.mxu0 %v278
    %343 = vmatpush.bf16.xpose.msra.mxu0 %v275
    %344 = vmatpush.bf16.xpose.msra.mxu0 %v272
    %345 = vmatpush.bf16.xpose.msra.mxu0 %v269
    %346 = vmatpush.bf16.xpose.msra.mxu0 %v266
    %347 = vmatmul.bf16.gmra.mxu0 %v215
    %v348 = vpop.f32.mrf.mxu0
    %v349 = vadd.f32 0.0, %v348
    %v350 = vpop.f32.mrf.mxu0
    %351 = vdwg.mxu0
    %352 = vmatpush.bf16.xpose.msra.mxu0 %v311
    %353 = vmatpush.bf16.xpose.msra.mxu0 %v308
    %354 = vmatpush.bf16.xpose.msra.mxu0 %v305
    %355 = vmatpush.bf16.xpose.msra.mxu0 %v302
    %356 = vmatpush.bf16.xpose.msra.mxu0 %v299
    %357 = vmatpush.bf16.xpose.msra.mxu0 %v296
    %358 = vmatpush.bf16.xpose.msra.mxu0 %v293
    %359 = vmatpush.bf16.xpose.msra.mxu0 %v290
    %360 = vmatmul.bf16.gmra.mxu0 %v215
    %v361 = vpop.f32.mrf.mxu0
    %v362 = vadd.f32 0.0, %v361
    %v363 = vpop.f32.mrf.mxu0
    %364 = vdwg.mxu0
    %v366 = vsel %vm213, %v114, 0
    %v369 = vsel %vm213, %v82, 0
    %v372 = vsel %vm213, %v83, 0
    %v375 = vsel %vm213, %v84, 0
    %v378 = vsel %vm213, %v85, 0
    %v381 = vsel %vm213, %v86, 0
    %v384 = vsel %vm213, %v87, 0
    %v387 = vsel %vm213, %v88, 0
    %v390 = vsel %vm213, %v89, 0
    %v393 = vsel %vm213, %v90, 0
    %v396 = vsel %vm213, %v91, 0
    %v399 = vsel %vm213, %v92, 0
    %v402 = vsel %vm213, %v93, 0
    %v405 = vsel %vm213, %v94, 0
    %v408 = vsel %vm213, %v95, 0
    %v411 = vsel %vm213, %v96, 0
    %v414 = vsel %vm213, %v97, 0
    %v417 = vsel %vm213, %v98, 0
    %v420 = vsel %vm213, %v99, 0
    %v423 = vsel %vm213, %v100, 0
    %v426 = vsel %vm213, %v101, 0
    %v429 = vsel %vm213, %v102, 0
    %v432 = vsel %vm213, %v103, 0
    %v435 = vsel %vm213, %v104, 0
    %v438 = vsel %vm213, %v105, 0
    %v441 = vsel %vm213, %v106, 0
    %v444 = vsel %vm213, %v107, 0
    %v447 = vsel %vm213, %v108, 0
    %v450 = vsel %vm213, %v109, 0
    %v453 = vsel %vm213, %v110, 0
    %v456 = vsel %vm213, %v111, 0
    %v459 = vsel %vm213, %v112, 0
    %v462 = vsel %vm213, %v113, 0
    %464 = vmatpush.bf16.xpose.msra.mxu0 %v390
    %465 = vmatpush.bf16.xpose.msra.mxu0 %v387
    %466 = vmatpush.bf16.xpose.msra.mxu0 %v384
    %467 = vmatpush.bf16.xpose.msra.mxu0 %v381
    %468 = vmatpush.bf16.xpose.msra.mxu0 %v378
    %469 = vmatpush.bf16.xpose.msra.mxu0 %v375
    %470 = vmatpush.bf16.xpose.msra.mxu0 %v372
    %471 = vmatpush.bf16.xpose.msra.mxu0 %v369
    %472 = vmatmul.bf16.gmra.mxu0 %v366
    %v473 = vpop.f32.mrf.mxu0
    %v474 = vadd.f32 %v323, %v473
    %v475 = vpop.f32.mrf.mxu0
    %476 = vdwg.mxu0
    %477 = vmatpush.bf16.xpose.msra.mxu0 %v414
    %478 = vmatpush.bf16.xpose.msra.mxu0 %v411
    %479 = vmatpush.bf16.xpose.msra.mxu0 %v408
    %480 = vmatpush.bf16.xpose.msra.mxu0 %v405
    %481 = vmatpush.bf16.xpose.msra.mxu0 %v402
    %482 = vmatpush.bf16.xpose.msra.mxu0 %v399
    %483 = vmatpush.bf16.xpose.msra.mxu0 %v396
    %484 = vmatpush.bf16.xpose.msra.mxu0 %v393
    %485 = vmatmul.bf16.gmra.mxu0 %v366
    %v486 = vpop.f32.mrf.mxu0
    %v487 = vadd.f32 %v336, %v486
    %v488 = vpop.f32.mrf.mxu0
    %489 = vdwg.mxu0
    %490 = vmatpush.bf16.xpose.msra.mxu0 %v438
    %491 = vmatpush.bf16.xpose.msra.mxu0 %v435
    %492 = vmatpush.bf16.xpose.msra.mxu0 %v432
    %493 = vmatpush.bf16.xpose.msra.mxu0 %v429
    %494 = vmatpush.bf16.xpose.msra.mxu0 %v426
    %495 = vmatpush.bf16.xpose.msra.mxu0 %v423
    %496 = vmatpush.bf16.xpose.msra.mxu0 %v420
    %497 = vmatpush.bf16.xpose.msra.mxu0 %v417
    %498 = vmatmul.bf16.gmra.mxu0 %v366
    %v499 = vpop.f32.mrf.mxu0
    %v500 = vadd.f32 %v349, %v499
    %v501 = vpop.f32.mrf.mxu0
    %502 = vdwg.mxu0
    %503 = vmatpush.bf16.xpose.msra.mxu0 %v462
    %504 = vmatpush.bf16.xpose.msra.mxu0 %v459
    %505 = vmatpush.bf16.xpose.msra.mxu0 %v456
    %506 = vmatpush.bf16.xpose.msra.mxu0 %v453
    %507 = vmatpush.bf16.xpose.msra.mxu0 %v450
    %508 = vmatpush.bf16.xpose.msra.mxu0 %v447
    %509 = vmatpush.bf16.xpose.msra.mxu0 %v444
    %510 = vmatpush.bf16.xpose.msra.mxu0 %v441
    %511 = vmatmul.bf16.gmra.mxu0 %v366
    %v512 = vpop.f32.mrf.mxu0
    %v513 = vadd.f32 %v362, %v512
    %v514 = vpop.f32.mrf.mxu0
    %515 = vdwg.mxu0
    %v516 = vld [vmem:[%s0 + $0x2] sm:$0xff]
    %v517 = vld [vmem:[%s0 + $0xa] sm:$0xff]
    %v518 = vld [vmem:[%s0 + $0x1a] sm:$0xff]
    %v519 = vld [vmem:[%s0 + $0x22] sm:$0xff]
    %v520 = vld [vmem:[%s0 + $0x32] sm:$0xff]
    %v521 = vld [vmem:[%s0 + $0x3a] sm:$0xff]
    %v522 = vld [vmem:[%s0 + $0x4a] sm:$0xff]
    %v523 = vld [vmem:[%s0 + $0x52] sm:$0xff]
    %v524 = vld [vmem:[%s0 + $0x62] sm:$0xff]
    %v525 = vld [vmem:[%s0 + $0x6a] sm:$0xff]
    %v526 = vld [vmem:[%s0 + $0x7a] sm:$0xff]
    %v527 = vld [vmem:[%s0 + $0x82] sm:$0xff]
    %v528 = vld [vmem:[%s0 + $0x92] sm:$0xff]
    %v529 = vld [vmem:[%s0 + $0x9a] sm:$0xff]
    %v530 = vld [vmem:[%s0 + $0xaa] sm:$0xff]
    %v531 = vld [vmem:[%s0 + $0xb2] sm:$0xff]
    %v532 = vld [vmem:[%s0 + $0xc2] sm:$0xff]
    %v533 = vld [vmem:[%s0 + $0xca] sm:$0xff]
    %v534 = vld [vmem:[%s0 + $0xda] sm:$0xff]
    %v535 = vld [vmem:[%s0 + $0xe2] sm:$0xff]
    %v536 = vld [vmem:[%s0 + $0xf2] sm:$0xff]
    %v537 = vld [vmem:[%s0 + $0xfa] sm:$0xff]
    %v538 = vld [vmem:[%s0 + $0x10a] sm:$0xff]
    %v539 = vld [vmem:[%s0 + $0x112] sm:$0xff]
    %v540 = vld [vmem:[%s0 + $0x122] sm:$0xff]
    %v541 = vld [vmem:[%s0 + $0x12a] sm:$0xff]
    %v542 = vld [vmem:[%s0 + $0x13a] sm:$0xff]
    %v543 = vld [vmem:[%s0 + $0x142] sm:$0xff]
    %v544 = vld [vmem:[%s0 + $0x152] sm:$0xff]
    %v545 = vld [vmem:[%s0 + $0x15a] sm:$0xff]
    %v546 = vld [vmem:[%s0 + $0x16a] sm:$0xff]
    %v547 = vld [vmem:[%s0 + $0x172] sm:$0xff]
    %v548 = vld [vmem:[%s0 + $0x1b2] sm:$0xff]
    %v549 = vld [vmem:[%s0 + $0x1ba] sm:$0xff]
    %v550 = vld [vmem:[%s0 + $0x1ca] sm:$0xff]
    %v551 = vld [vmem:[%s0 + $0x1d2] sm:$0xff]
    %v552 = vld [vmem:[%s0 + $0x1e2] sm:$0xff]
    %v553 = vld [vmem:[%s0 + $0x1ea] sm:$0xff]
    %v554 = vld [vmem:[%s0 + $0x1fa] sm:$0xff]
    %v555 = vld [vmem:[%s0 + $0x202] sm:$0xff]
    %v556 = vld [vmem:[%s0 + $0x212] sm:$0xff]
    %v557 = vld [vmem:[%s0 + $0x21a] sm:$0xff]
    %v558 = vld [vmem:[%s0 + $0x22a] sm:$0xff]
    %v559 = vld [vmem:[%s0 + $0x232] sm:$0xff]
    %v560 = vld [vmem:[%s0 + $0x242] sm:$0xff]
    %v561 = vld [vmem:[%s0 + $0x24a] sm:$0xff]
    %v562 = vld [vmem:[%s0 + $0x25a] sm:$0xff]
    %v563 = vld [vmem:[%s0 + $0x262] sm:$0xff]
    %v564 = vld [vmem:[%s0 + $0x272] sm:$0xff]
    %v565 = vld [vmem:[%s0 + $0x27a] sm:$0xff]
    %v566 = vld [vmem:[%s0 + $0x28a] sm:$0xff]
    %v567 = vld [vmem:[%s0 + $0x292] sm:$0xff]
    %v568 = vld [vmem:[%s0 + $0x2a2] sm:$0xff]
    %v569 = vld [vmem:[%s0 + $0x2aa] sm:$0xff]
    %v570 = vld [vmem:[%s0 + $0x2ba] sm:$0xff]
    %v571 = vld [vmem:[%s0 + $0x2c2] sm:$0xff]
    %v572 = vld [vmem:[%s0 + $0x2d2] sm:$0xff]
    %v573 = vld [vmem:[%s0 + $0x2da] sm:$0xff]
    %v574 = vld [vmem:[%s0 + $0x2ea] sm:$0xff]
    %v575 = vld [vmem:[%s0 + $0x2f2] sm:$0xff]
    %v576 = vld [vmem:[%s0 + $0x302] sm:$0xff]
    %v577 = vld [vmem:[%s0 + $0x30a] sm:$0xff]
    %v578 = vld [vmem:[%s0 + $0x31a] sm:$0xff]
    %v579 = vld [vmem:[%s0 + $0x322] sm:$0xff]
    %v580 = vpack.c.bf16 %v517, %v516
    %v581 = vpack.c.bf16 %v519, %v518
    %v582 = vpack.c.bf16 %v521, %v520
    %v583 = vpack.c.bf16 %v523, %v522
    %v584 = vpack.c.bf16 %v525, %v524
    %v585 = vpack.c.bf16 %v527, %v526
    %v586 = vpack.c.bf16 %v529, %v528
    %v587 = vpack.c.bf16 %v531, %v530
    %v588 = vpack.c.bf16 %v533, %v532
    %v589 = vpack.c.bf16 %v535, %v534
    %v590 = vpack.c.bf16 %v537, %v536
    %v591 = vpack.c.bf16 %v539, %v538
    %v592 = vpack.c.bf16 %v541, %v540
    %v593 = vpack.c.bf16 %v543, %v542
    %v594 = vpack.c.bf16 %v545, %v544
    %v595 = vpack.c.bf16 %v547, %v546
    %v596 = vpack.c.bf16 %v549, %v548
    %v597 = vpack.c.bf16 %v551, %v550
    %v598 = vpack.c.bf16 %v553, %v552
    %v599 = vpack.c.bf16 %v555, %v554
    %v600 = vpack.c.bf16 %v557, %v556
    %v601 = vpack.c.bf16 %v559, %v558
    %v602 = vpack.c.bf16 %v561, %v560
    %v603 = vpack.c.bf16 %v563, %v562
    %v604 = vpack.c.bf16 %v565, %v564
    %v605 = vpack.c.bf16 %v567, %v566
    %v606 = vpack.c.bf16 %v569, %v568
    %v607 = vpack.c.bf16 %v571, %v570
    %v608 = vpack.c.bf16 %v573, %v572
    %v609 = vpack.c.bf16 %v575, %v574
    %v610 = vpack.c.bf16 %v577, %v576
    %v611 = vpack.c.bf16 %v579, %v578
    %s612 = scalar_lea.vmem %s1, 8
    %v613 = vld [vmem:[%s612] sm:$0xf]
    %v615 = vsel %vm213, %v613, 0
    %v618 = vsel %vm213, %v580, 0
    %v621 = vsel %vm213, %v581, 0
    %v624 = vsel %vm213, %v582, 0
    %v627 = vsel %vm213, %v583, 0
    %v630 = vsel %vm213, %v584, 0
    %v633 = vsel %vm213, %v585, 0
    %v636 = vsel %vm213, %v586, 0
    %v639 = vsel %vm213, %v587, 0
    %v642 = vsel %vm213, %v588, 0
    %v645 = vsel %vm213, %v589, 0
    %v648 = vsel %vm213, %v590, 0
    %v651 = vsel %vm213, %v591, 0
    %v654 = vsel %vm213, %v592, 0
    %v657 = vsel %vm213, %v593, 0
    %v660 = vsel %vm213, %v594, 0
    %v663 = vsel %vm213, %v595, 0
    %v666 = vsel %vm213, %v596, 0
    %v669 = vsel %vm213, %v597, 0
    %v672 = vsel %vm213, %v598, 0
    %v675 = vsel %vm213, %v599, 0
    %v678 = vsel %vm213, %v600, 0
    %v681 = vsel %vm213, %v601, 0
    %v684 = vsel %vm213, %v602, 0
    %v687 = vsel %vm213, %v603, 0
    %v690 = vsel %vm213, %v604, 0
    %v693 = vsel %vm213, %v605, 0
    %v696 = vsel %vm213, %v606, 0
    %v699 = vsel %vm213, %v607, 0
    %v702 = vsel %vm213, %v608, 0
    %v705 = vsel %vm213, %v609, 0
    %v708 = vsel %vm213, %v610, 0
    %v711 = vsel %vm213, %v611, 0
    %713 = vmatpush.bf16.xpose.msra.mxu0 %v639
    %714 = vmatpush.bf16.xpose.msra.mxu0 %v636
    %715 = vmatpush.bf16.xpose.msra.mxu0 %v633
    %716 = vmatpush.bf16.xpose.msra.mxu0 %v630
    %717 = vmatpush.bf16.xpose.msra.mxu0 %v627
    %718 = vmatpush.bf16.xpose.msra.mxu0 %v624
    %719 = vmatpush.bf16.xpose.msra.mxu0 %v621
    %720 = vmatpush.bf16.xpose.msra.mxu0 %v618
    %721 = vmatmul.bf16.gmra.mxu0 %v615
    %v722 = vpop.f32.mrf.mxu0
    %v723 = vadd.f32 0.0, %v722
    %v724 = vpop.f32.mrf.mxu0
    %725 = vdwg.mxu0
    %726 = vmatpush.bf16.xpose.msra.mxu0 %v663
    %727 = vmatpush.bf16.xpose.msra.mxu0 %v660
    %728 = vmatpush.bf16.xpose.msra.mxu0 %v657
    %729 = vmatpush.bf16.xpose.msra.mxu0 %v654
    %730 = vmatpush.bf16.xpose.msra.mxu0 %v651
    %731 = vmatpush.bf16.xpose.msra.mxu0 %v648
    %732 = vmatpush.bf16.xpose.msra.mxu0 %v645
    %733 = vmatpush.bf16.xpose.msra.mxu0 %v642
    %734 = vmatmul.bf16.gmra.mxu0 %v615
    %v735 = vpop.f32.mrf.mxu0
    %v736 = vadd.f32 0.0, %v735
    %v737 = vpop.f32.mrf.mxu0
    %738 = vdwg.mxu0
    %739 = vmatpush.bf16.xpose.msra.mxu0 %v687
    %740 = vmatpush.bf16.xpose.msra.mxu0 %v684
    %741 = vmatpush.bf16.xpose.msra.mxu0 %v681
    %742 = vmatpush.bf16.xpose.msra.mxu0 %v678
    %743 = vmatpush.bf16.xpose.msra.mxu0 %v675
    %744 = vmatpush.bf16.xpose.msra.mxu0 %v672
    %745 = vmatpush.bf16.xpose.msra.mxu0 %v669
    %746 = vmatpush.bf16.xpose.msra.mxu0 %v666
    %747 = vmatmul.bf16.gmra.mxu0 %v615
    %v748 = vpop.f32.mrf.mxu0
    %v749 = vadd.f32 0.0, %v748
    %v750 = vpop.f32.mrf.mxu0
    %751 = vdwg.mxu0
    %752 = vmatpush.bf16.xpose.msra.mxu0 %v711
    %753 = vmatpush.bf16.xpose.msra.mxu0 %v708
    %754 = vmatpush.bf16.xpose.msra.mxu0 %v705
    %755 = vmatpush.bf16.xpose.msra.mxu0 %v702
    %756 = vmatpush.bf16.xpose.msra.mxu0 %v699
    %757 = vmatpush.bf16.xpose.msra.mxu0 %v696
    %758 = vmatpush.bf16.xpose.msra.mxu0 %v693
    %759 = vmatpush.bf16.xpose.msra.mxu0 %v690
    %760 = vmatmul.bf16.gmra.mxu0 %v615
    %v761 = vpop.f32.mrf.mxu0
    %v762 = vadd.f32 0.0, %v761
    %v763 = vpop.f32.mrf.mxu0
    %764 = vdwg.mxu0
    %v765 = vadd.f32 %v474, %v723
    %v766 = vadd.f32 %v487, %v736
    %v767 = vadd.f32 %v500, %v749
    %v768 = vadd.f32 %v513, %v762
    %s769 = scalar_lea.vmem %s0, 24
    %v770 = vld [vmem:[%s769] sm:$0xff]
    %v771 = vld [vmem:[%s769 + $0x8] sm:$0xff]
    %v772 = vld [vmem:[%s769 + $0x18] sm:$0xff]
    %v773 = vld [vmem:[%s769 + $0x20] sm:$0xff]
    %v774 = vld [vmem:[%s769 + $0x30] sm:$0xff]
    %v775 = vld [vmem:[%s769 + $0x38] sm:$0xff]
    %v776 = vld [vmem:[%s769 + $0x48] sm:$0xff]
    %v777 = vld [vmem:[%s769 + $0x50] sm:$0xff]
    %v778 = vld [vmem:[%s769 + $0x60] sm:$0xff]
    %v779 = vld [vmem:[%s769 + $0x68] sm:$0xff]
    %v780 = vld [vmem:[%s769 + $0x78] sm:$0xff]
    %v781 = vld [vmem:[%s769 + $0x80] sm:$0xff]
    %v782 = vld [vmem:[%s769 + $0x90] sm:$0xff]
    %v783 = vld [vmem:[%s769 + $0x98] sm:$0xff]
    %v784 = vld [vmem:[%s769 + $0xa8] sm:$0xff]
    %v785 = vld [vmem:[%s769 + $0xb0] sm:$0xff]
    %v786 = vld [vmem:[%s769 + $0xc0] sm:$0xff]
    %v787 = vld [vmem:[%s769 + $0xc8] sm:$0xff]
    %v788 = vld [vmem:[%s769 + $0xd8] sm:$0xff]
    %v789 = vld [vmem:[%s769 + $0xe0] sm:$0xff]
    %v790 = vld [vmem:[%s769 + $0xf0] sm:$0xff]
    %v791 = vld [vmem:[%s769 + $0xf8] sm:$0xff]
    %v792 = vld [vmem:[%s769 + $0x108] sm:$0xff]
    %v793 = vld [vmem:[%s769 + $0x110] sm:$0xff]
    %v794 = vld [vmem:[%s769 + $0x120] sm:$0xff]
    %v795 = vld [vmem:[%s769 + $0x128] sm:$0xff]
    %v796 = vld [vmem:[%s769 + $0x138] sm:$0xff]
    %v797 = vld [vmem:[%s769 + $0x140] sm:$0xff]
    %v798 = vld [vmem:[%s769 + $0x150] sm:$0xff]
    %v799 = vld [vmem:[%s769 + $0x158] sm:$0xff]
    %v800 = vld [vmem:[%s769 + $0x168] sm:$0xff]
    %v801 = vld [vmem:[%s769 + $0x170] sm:$0xff]
    %v802 = vld [vmem:[%s769 + $0x1b0] sm:$0xff]
    %v803 = vld [vmem:[%s769 + $0x1b8] sm:$0xff]
    %v804 = vld [vmem:[%s769 + $0x1c8] sm:$0xff]
    %v805 = vld [vmem:[%s769 + $0x1d0] sm:$0xff]
    %v806 = vld [vmem:[%s769 + $0x1e0] sm:$0xff]
    %v807 = vld [vmem:[%s769 + $0x1e8] sm:$0xff]
    %v808 = vld [vmem:[%s769 + $0x1f8] sm:$0xff]
    %v809 = vld [vmem:[%s769 + $0x200] sm:$0xff]
    %v810 = vld [vmem:[%s769 + $0x210] sm:$0xff]
    %v811 = vld [vmem:[%s769 + $0x218] sm:$0xff]
    %v812 = vld [vmem:[%s769 + $0x228] sm:$0xff]
    %v813 = vld [vmem:[%s769 + $0x230] sm:$0xff]
    %v814 = vld [vmem:[%s769 + $0x240] sm:$0xff]
    %v815 = vld [vmem:[%s769 + $0x248] sm:$0xff]
    %v816 = vld [vmem:[%s769 + $0x258] sm:$0xff]
    %v817 = vld [vmem:[%s769 + $0x260] sm:$0xff]
    %v818 = vld [vmem:[%s769 + $0x270] sm:$0xff]
    %v819 = vld [vmem:[%s769 + $0x278] sm:$0xff]
    %v820 = vld [vmem:[%s769 + $0x288] sm:$0xff]
    %v821 = vld [vmem:[%s769 + $0x290] sm:$0xff]
    %v822 = vld [vmem:[%s769 + $0x2a0] sm:$0xff]
    %v823 = vld [vmem:[%s769 + $0x2a8] sm:$0xff]
    %v824 = vld [vmem:[%s769 + $0x2b8] sm:$0xff]
    %v825 = vld [vmem:[%s769 + $0x2c0] sm:$0xff]
    %v826 = vld [vmem:[%s769 + $0x2d0] sm:$0xff]
    %v827 = vld [vmem:[%s769 + $0x2d8] sm:$0xff]
    %v828 = vld [vmem:[%s769 + $0x2e8] sm:$0xff]
    %v829 = vld [vmem:[%s769 + $0x2f0] sm:$0xff]
    %v830 = vld [vmem:[%s769 + $0x300] sm:$0xff]
    %v831 = vld [vmem:[%s769 + $0x308] sm:$0xff]
    %v832 = vld [vmem:[%s769 + $0x318] sm:$0xff]
    %v833 = vld [vmem:[%s769 + $0x320] sm:$0xff]
    %v834 = vpack.c.bf16 %v771, %v770
    %v835 = vpack.c.bf16 %v773, %v772
    %v836 = vpack.c.bf16 %v775, %v774
    %v837 = vpack.c.bf16 %v777, %v776
    %v838 = vpack.c.bf16 %v779, %v778
    %v839 = vpack.c.bf16 %v781, %v780
    %v840 = vpack.c.bf16 %v783, %v782
    %v841 = vpack.c.bf16 %v785, %v784
    %v842 = vpack.c.bf16 %v787, %v786
    %v843 = vpack.c.bf16 %v789, %v788
    %v844 = vpack.c.bf16 %v791, %v790
    %v845 = vpack.c.bf16 %v793, %v792
    %v846 = vpack.c.bf16 %v795, %v794
    %v847 = vpack.c.bf16 %v797, %v796
    %v848 = vpack.c.bf16 %v799, %v798
    %v849 = vpack.c.bf16 %v801, %v800
    %v850 = vpack.c.bf16 %v803, %v802
    %v851 = vpack.c.bf16 %v805, %v804
    %v852 = vpack.c.bf16 %v807, %v806
    %v853 = vpack.c.bf16 %v809, %v808
    %v854 = vpack.c.bf16 %v811, %v810
    %v855 = vpack.c.bf16 %v813, %v812
    %v856 = vpack.c.bf16 %v815, %v814
    %v857 = vpack.c.bf16 %v817, %v816
    %v858 = vpack.c.bf16 %v819, %v818
    %v859 = vpack.c.bf16 %v821, %v820
    %v860 = vpack.c.bf16 %v823, %v822
    %v861 = vpack.c.bf16 %v825, %v824
    %v862 = vpack.c.bf16 %v827, %v826
    %v863 = vpack.c.bf16 %v829, %v828
    %v864 = vpack.c.bf16 %v831, %v830
    %v865 = vpack.c.bf16 %v833, %v832
    %s866 = scalar_lea.vmem %s1, 12
    %v867 = vld [vmem:[%s866] sm:$0xf]
    %v869 = vsel %vm213, %v867, 0
    %v872 = vsel %vm213, %v834, 0
    %v875 = vsel %vm213, %v835, 0
    %v878 = vsel %vm213, %v836, 0
    %v881 = vsel %vm213, %v837, 0
    %v884 = vsel %vm213, %v838, 0
    %v887 = vsel %vm213, %v839, 0
    %v890 = vsel %vm213, %v840, 0
    %v893 = vsel %vm213, %v841, 0
    %v896 = vsel %vm213, %v842, 0
    %v899 = vsel %vm213, %v843, 0
    %v902 = vsel %vm213, %v844, 0
    %v905 = vsel %vm213, %v845, 0
    %v908 = vsel %vm213, %v846, 0
    %v911 = vsel %vm213, %v847, 0
    %v914 = vsel %vm213, %v848, 0
    %v917 = vsel %vm213, %v849, 0
    %v920 = vsel %vm213, %v850, 0
    %v923 = vsel %vm213, %v851, 0
    %v926 = vsel %vm213, %v852, 0
    %v929 = vsel %vm213, %v853, 0
    %v932 = vsel %vm213, %v854, 0
    %v935 = vsel %vm213, %v855, 0
    %v938 = vsel %vm213, %v856, 0
    %v941 = vsel %vm213, %v857, 0
    %v944 = vsel %vm213, %v858, 0
    %v947 = vsel %vm213, %v859, 0
    %v950 = vsel %vm213, %v860, 0
    %v953 = vsel %vm213, %v861, 0
    %v956 = vsel %vm213, %v862, 0
    %v959 = vsel %vm213, %v863, 0
    %v962 = vsel %vm213, %v864, 0
    %v965 = vsel %vm213, %v865, 0
    %967 = vmatpush.bf16.xpose.msra.mxu0 %v893
    %968 = vmatpush.bf16.xpose.msra.mxu0 %v890
    %969 = vmatpush.bf16.xpose.msra.mxu0 %v887
    %970 = vmatpush.bf16.xpose.msra.mxu0 %v884
    %971 = vmatpush.bf16.xpose.msra.mxu0 %v881
    %972 = vmatpush.bf16.xpose.msra.mxu0 %v878
    %973 = vmatpush.bf16.xpose.msra.mxu0 %v875
    %974 = vmatpush.bf16.xpose.msra.mxu0 %v872
    %975 = vmatmul.bf16.gmra.mxu0 %v869
    %v976 = vpop.f32.mrf.mxu0
    %v977 = vadd.f32 0.0, %v976
    %v978 = vpop.f32.mrf.mxu0
    %979 = vdwg.mxu0
    %980 = vmatpush.bf16.xpose.msra.mxu0 %v917
    %981 = vmatpush.bf16.xpose.msra.mxu0 %v914
    %982 = vmatpush.bf16.xpose.msra.mxu0 %v911
    %983 = vmatpush.bf16.xpose.msra.mxu0 %v908
    %984 = vmatpush.bf16.xpose.msra.mxu0 %v905
    %985 = vmatpush.bf16.xpose.msra.mxu0 %v902
    %986 = vmatpush.bf16.xpose.msra.mxu0 %v899
    %987 = vmatpush.bf16.xpose.msra.mxu0 %v896
    %988 = vmatmul.bf16.gmra.mxu0 %v869
    %v989 = vpop.f32.mrf.mxu0
    %v990 = vadd.f32 0.0, %v989
    %v991 = vpop.f32.mrf.mxu0
    %992 = vdwg.mxu0
    %993 = vmatpush.bf16.xpose.msra.mxu0 %v941
    %994 = vmatpush.bf16.xpose.msra.mxu0 %v938
    %995 = vmatpush.bf16.xpose.msra.mxu0 %v935
    %996 = vmatpush.bf16.xpose.msra.mxu0 %v932
    %997 = vmatpush.bf16.xpose.msra.mxu0 %v929
    %998 = vmatpush.bf16.xpose.msra.mxu0 %v926
    %999 = vmatpush.bf16.xpose.msra.mxu0 %v923
    %1000 = vmatpush.bf16.xpose.msra.mxu0 %v920
    %1001 = vmatmul.bf16.gmra.mxu0 %v869
    %v1002 = vpop.f32.mrf.mxu0
    %v1003 = vadd.f32 0.0, %v1002
    %v1004 = vpop.f32.mrf.mxu0
    %1005 = vdwg.mxu0
    %1006 = vmatpush.bf16.xpose.msra.mxu0 %v965
    %1007 = vmatpush.bf16.xpose.msra.mxu0 %v962
    %1008 = vmatpush.bf16.xpose.msra.mxu0 %v959
    %1009 = vmatpush.bf16.xpose.msra.mxu0 %v956
    %1010 = vmatpush.bf16.xpose.msra.mxu0 %v953
    %1011 = vmatpush.bf16.xpose.msra.mxu0 %v950
    %1012 = vmatpush.bf16.xpose.msra.mxu0 %v947
    %1013 = vmatpush.bf16.xpose.msra.mxu0 %v944
    %1014 = vmatmul.bf16.gmra.mxu0 %v869
    %v1015 = vpop.f32.mrf.mxu0
    %v1016 = vadd.f32 0.0, %v1015
    %v1017 = vpop.f32.mrf.mxu0
    %1018 = vdwg.mxu0
    %v1019 = vadd.f32 %v765, %v977
    %v1020 = vadd.f32 %v766, %v990
    %v1021 = vadd.f32 %v767, %v1003
    %v1022 = vadd.f32 %v768, %v1016
    %v1023 = vld [vmem:[%s769 + $0x1] sm:$0xff]
    %v1024 = vld [vmem:[%s769 + $0x9] sm:$0xff]
    %v1025 = vld [vmem:[%s769 + $0x19] sm:$0xff]
    %v1026 = vld [vmem:[%s769 + $0x21] sm:$0xff]
    %v1027 = vld [vmem:[%s769 + $0x31] sm:$0xff]
    %v1028 = vld [vmem:[%s769 + $0x39] sm:$0xff]
    %v1029 = vld [vmem:[%s769 + $0x49] sm:$0xff]
    %v1030 = vld [vmem:[%s769 + $0x51] sm:$0xff]
    %v1031 = vld [vmem:[%s769 + $0x61] sm:$0xff]
    %v1032 = vld [vmem:[%s769 + $0x69] sm:$0xff]
    %v1033 = vld [vmem:[%s769 + $0x79] sm:$0xff]
    %v1034 = vld [vmem:[%s769 + $0x81] sm:$0xff]
    %v1035 = vld [vmem:[%s769 + $0x91] sm:$0xff]
    %v1036 = vld [vmem:[%s769 + $0x99] sm:$0xff]
    %v1037 = vld [vmem:[%s769 + $0xa9] sm:$0xff]
    %v1038 = vld [vmem:[%s769 + $0xb1] sm:$0xff]
    %v1039 = vld [vmem:[%s769 + $0xc1] sm:$0xff]
    %v1040 = vld [vmem:[%s769 + $0xc9] sm:$0xff]
    %v1041 = vld [vmem:[%s769 + $0xd9] sm:$0xff]
    %v1042 = vld [vmem:[%s769 + $0xe1] sm:$0xff]
    %v1043 = vld [vmem:[%s769 + $0xf1] sm:$0xff]
    %v1044 = vld [vmem:[%s769 + $0xf9] sm:$0xff]
    %v1045 = vld [vmem:[%s769 + $0x109] sm:$0xff]
    %v1046 = vld [vmem:[%s769 + $0x111] sm:$0xff]
    %v1047 = vld [vmem:[%s769 + $0x121] sm:$0xff]
    %v1048 = vld [vmem:[%s769 + $0x129] sm:$0xff]
    %v1049 = vld [vmem:[%s769 + $0x139] sm:$0xff]
    %v1050 = vld [vmem:[%s769 + $0x141] sm:$0xff]
    %v1051 = vld [vmem:[%s769 + $0x151] sm:$0xff]
    %v1052 = vld [vmem:[%s769 + $0x159] sm:$0xff]
    %v1053 = vld [vmem:[%s769 + $0x169] sm:$0xff]
    %v1054 = vld [vmem:[%s769 + $0x171] sm:$0xff]
    %v1055 = vld [vmem:[%s769 + $0x1b1] sm:$0xff]
    %v1056 = vld [vmem:[%s769 + $0x1b9] sm:$0xff]
    %v1057 = vld [vmem:[%s769 + $0x1c9] sm:$0xff]
    %v1058 = vld [vmem:[%s769 + $0x1d1] sm:$0xff]
    %v1059 = vld [vmem:[%s769 + $0x1e1] sm:$0xff]
    %v1060 = vld [vmem:[%s769 + $0x1e9] sm:$0xff]
    %v1061 = vld [vmem:[%s769 + $0x1f9] sm:$0xff]
    %v1062 = vld [vmem:[%s769 + $0x201] sm:$0xff]
    %v1063 = vld [vmem:[%s769 + $0x211] sm:$0xff]
    %v1064 = vld [vmem:[%s769 + $0x219] sm:$0xff]
    %v1065 = vld [vmem:[%s769 + $0x229] sm:$0xff]
    %v1066 = vld [vmem:[%s769 + $0x231] sm:$0xff]
    %v1067 = vld [vmem:[%s769 + $0x241] sm:$0xff]
    %v1068 = vld [vmem:[%s769 + $0x249] sm:$0xff]
    %v1069 = vld [vmem:[%s769 + $0x259] sm:$0xff]
    %v1070 = vld [vmem:[%s769 + $0x261] sm:$0xff]
    %v1071 = vld [vmem:[%s769 + $0x271] sm:$0xff]
    %v1072 = vld [vmem:[%s769 + $0x279] sm:$0xff]
    %v1073 = vld [vmem:[%s769 + $0x289] sm:$0xff]
    %v1074 = vld [vmem:[%s769 + $0x291] sm:$0xff]
    %v1075 = vld [vmem:[%s769 + $0x2a1] sm:$0xff]
    %v1076 = vld [vmem:[%s769 + $0x2a9] sm:$0xff]
    %v1077 = vld [vmem:[%s769 + $0x2b9] sm:$0xff]
    %v1078 = vld [vmem:[%s769 + $0x2c1] sm:$0xff]
    %v1079 = vld [vmem:[%s769 + $0x2d1] sm:$0xff]
    %v1080 = vld [vmem:[%s769 + $0x2d9] sm:$0xff]
    %v1081 = vld [vmem:[%s769 + $0x2e9] sm:$0xff]
    %v1082 = vld [vmem:[%s769 + $0x2f1] sm:$0xff]
    %v1083 = vld [vmem:[%s769 + $0x301] sm:$0xff]
    %v1084 = vld [vmem:[%s769 + $0x309] sm:$0xff]
    %v1085 = vld [vmem:[%s769 + $0x319] sm:$0xff]
    %v1086 = vld [vmem:[%s769 + $0x321] sm:$0xff]
    %v1087 = vpack.c.bf16 %v1024, %v1023
    %v1088 = vpack.c.bf16 %v1026, %v1025
    %v1089 = vpack.c.bf16 %v1028, %v1027
    %v1090 = vpack.c.bf16 %v1030, %v1029
    %v1091 = vpack.c.bf16 %v1032, %v1031
    %v1092 = vpack.c.bf16 %v1034, %v1033
    %v1093 = vpack.c.bf16 %v1036, %v1035
    %v1094 = vpack.c.bf16 %v1038, %v1037
    %v1095 = vpack.c.bf16 %v1040, %v1039
    %v1096 = vpack.c.bf16 %v1042, %v1041
    %v1097 = vpack.c.bf16 %v1044, %v1043
    %v1098 = vpack.c.bf16 %v1046, %v1045
    %v1099 = vpack.c.bf16 %v1048, %v1047
    %v1100 = vpack.c.bf16 %v1050, %v1049
    %v1101 = vpack.c.bf16 %v1052, %v1051
    %v1102 = vpack.c.bf16 %v1054, %v1053
    %v1103 = vpack.c.bf16 %v1056, %v1055
    %v1104 = vpack.c.bf16 %v1058, %v1057
    %v1105 = vpack.c.bf16 %v1060, %v1059
    %v1106 = vpack.c.bf16 %v1062, %v1061
    %v1107 = vpack.c.bf16 %v1064, %v1063
    %v1108 = vpack.c.bf16 %v1066, %v1065
    %v1109 = vpack.c.bf16 %v1068, %v1067
    %v1110 = vpack.c.bf16 %v1070, %v1069
    %v1111 = vpack.c.bf16 %v1072, %v1071
    %v1112 = vpack.c.bf16 %v1074, %v1073
    %v1113 = vpack.c.bf16 %v1076, %v1075
    %v1114 = vpack.c.bf16 %v1078, %v1077
    %v1115 = vpack.c.bf16 %v1080, %v1079
    %v1116 = vpack.c.bf16 %v1082, %v1081
    %v1117 = vpack.c.bf16 %v1084, %v1083
    %v1118 = vpack.c.bf16 %v1086, %v1085
    %s1119 = scalar_lea.vmem %s1, 16
    %v1120 = vld [vmem:[%s1119] sm:$0xf]
    %v1122 = vsel %vm213, %v1120, 0
    %v1125 = vsel %vm213, %v1087, 0
    %v1128 = vsel %vm213, %v1088, 0
    %v1131 = vsel %vm213, %v1089, 0
    %v1134 = vsel %vm213, %v1090, 0
    %v1137 = vsel %vm213, %v1091, 0
    %v1140 = vsel %vm213, %v1092, 0
    %v1143 = vsel %vm213, %v1093, 0
    %v1146 = vsel %vm213, %v1094, 0
    %v1149 = vsel %vm213, %v1095, 0
    %v1152 = vsel %vm213, %v1096, 0
    %v1155 = vsel %vm213, %v1097, 0
    %v1158 = vsel %vm213, %v1098, 0
    %v1161 = vsel %vm213, %v1099, 0
    %v1164 = vsel %vm213, %v1100, 0
    %v1167 = vsel %vm213, %v1101, 0
    %v1170 = vsel %vm213, %v1102, 0
    %v1173 = vsel %vm213, %v1103, 0
    %v1176 = vsel %vm213, %v1104, 0
    %v1179 = vsel %vm213, %v1105, 0
    %v1182 = vsel %vm213, %v1106, 0
    %v1185 = vsel %vm213, %v1107, 0
    %v1188 = vsel %vm213, %v1108, 0
    %v1191 = vsel %vm213, %v1109, 0
    %v1194 = vsel %vm213, %v1110, 0
    %v1197 = vsel %vm213, %v1111, 0
    %v1200 = vsel %vm213, %v1112, 0
    %v1203 = vsel %vm213, %v1113, 0
    %v1206 = vsel %vm213, %v1114, 0
    %v1209 = vsel %vm213, %v1115, 0
    %v1212 = vsel %vm213, %v1116, 0
    %v1215 = vsel %vm213, %v1117, 0
    %v1218 = vsel %vm213, %v1118, 0
    %1220 = vmatpush.bf16.xpose.msra.mxu0 %v1146
    %1221 = vmatpush.bf16.xpose.msra.mxu0 %v1143
    %1222 = vmatpush.bf16.xpose.msra.mxu0 %v1140
    %1223 = vmatpush.bf16.xpose.msra.mxu0 %v1137
    %1224 = vmatpush.bf16.xpose.msra.mxu0 %v1134
    %1225 = vmatpush.bf16.xpose.msra.mxu0 %v1131
    %1226 = vmatpush.bf16.xpose.msra.mxu0 %v1128
    %1227 = vmatpush.bf16.xpose.msra.mxu0 %v1125
    %1228 = vmatmul.bf16.gmra.mxu0 %v1122
    %v1229 = vpop.f32.mrf.mxu0
    %v1230 = vadd.f32 0.0, %v1229
    %v1231 = vpop.f32.mrf.mxu0
    %1232 = vdwg.mxu0
    %1233 = vmatpush.bf16.xpose.msra.mxu0 %v1170
    %1234 = vmatpush.bf16.xpose.msra.mxu0 %v1167
    %1235 = vmatpush.bf16.xpose.msra.mxu0 %v1164
    %1236 = vmatpush.bf16.xpose.msra.mxu0 %v1161
    %1237 = vmatpush.bf16.xpose.msra.mxu0 %v1158
    %1238 = vmatpush.bf16.xpose.msra.mxu0 %v1155
    %1239 = vmatpush.bf16.xpose.msra.mxu0 %v1152
    %1240 = vmatpush.bf16.xpose.msra.mxu0 %v1149
    %1241 = vmatmul.bf16.gmra.mxu0 %v1122
    %v1242 = vpop.f32.mrf.mxu0
    %v1243 = vadd.f32 0.0, %v1242
    %v1244 = vpop.f32.mrf.mxu0
    %1245 = vdwg.mxu0
    %1246 = vmatpush.bf16.xpose.msra.mxu0 %v1194
    %1247 = vmatpush.bf16.xpose.msra.mxu0 %v1191
    %1248 = vmatpush.bf16.xpose.msra.mxu0 %v1188
    %1249 = vmatpush.bf16.xpose.msra.mxu0 %v1185
    %1250 = vmatpush.bf16.xpose.msra.mxu0 %v1182
    %1251 = vmatpush.bf16.xpose.msra.mxu0 %v1179
    %1252 = vmatpush.bf16.xpose.msra.mxu0 %v1176
    %1253 = vmatpush.bf16.xpose.msra.mxu0 %v1173
    %1254 = vmatmul.bf16.gmra.mxu0 %v1122
    %v1255 = vpop.f32.mrf.mxu0
    %v1256 = vadd.f32 0.0, %v1255
    %v1257 = vpop.f32.mrf.mxu0
    %1258 = vdwg.mxu0
    %1259 = vmatpush.bf16.xpose.msra.mxu0 %v1218
    %1260 = vmatpush.bf16.xpose.msra.mxu0 %v1215
    %1261 = vmatpush.bf16.xpose.msra.mxu0 %v1212
    %1262 = vmatpush.bf16.xpose.msra.mxu0 %v1209
    %1263 = vmatpush.bf16.xpose.msra.mxu0 %v1206
    %1264 = vmatpush.bf16.xpose.msra.mxu0 %v1203
    %1265 = vmatpush.bf16.xpose.msra.mxu0 %v1200
    %1266 = vmatpush.bf16.xpose.msra.mxu0 %v1197
    %1267 = vmatmul.bf16.gmra.mxu0 %v1122
    %v1268 = vpop.f32.mrf.mxu0
    %v1269 = vadd.f32 0.0, %v1268
    %v1270 = vpop.f32.mrf.mxu0
    %1271 = vdwg.mxu0
    %v1272 = vadd.f32 %v1019, %v1230
    %v1273 = vadd.f32 %v1020, %v1243
    %v1274 = vadd.f32 %v1021, %v1256
    %v1275 = vadd.f32 %v1022, %v1269
    %v1276 = vld [vmem:[%s769 + $0x2] sm:$0xff]
    %v1277 = vld [vmem:[%s769 + $0xa] sm:$0xff]
    %v1278 = vld [vmem:[%s769 + $0x1a] sm:$0xff]
    %v1279 = vld [vmem:[%s769 + $0x22] sm:$0xff]
    %v1280 = vld [vmem:[%s769 + $0x32] sm:$0xff]
    %v1281 = vld [vmem:[%s769 + $0x3a] sm:$0xff]
    %v1282 = vld [vmem:[%s769 + $0x4a] sm:$0xff]
    %v1283 = vld [vmem:[%s769 + $0x52] sm:$0xff]
    %v1284 = vld [vmem:[%s769 + $0x62] sm:$0xff]
    %v1285 = vld [vmem:[%s769 + $0x6a] sm:$0xff]
    %v1286 = vld [vmem:[%s769 + $0x7a] sm:$0xff]
    %v1287 = vld [vmem:[%s769 + $0x82] sm:$0xff]
    %v1288 = vld [vmem:[%s769 + $0x92] sm:$0xff]
    %v1289 = vld [vmem:[%s769 + $0x9a] sm:$0xff]
    %v1290 = vld [vmem:[%s769 + $0xaa] sm:$0xff]
    %v1291 = vld [vmem:[%s769 + $0xb2] sm:$0xff]
    %v1292 = vld [vmem:[%s769 + $0xc2] sm:$0xff]
    %v1293 = vld [vmem:[%s769 + $0xca] sm:$0xff]
    %v1294 = vld [vmem:[%s769 + $0xda] sm:$0xff]
    %v1295 = vld [vmem:[%s769 + $0xe2] sm:$0xff]
    %v1296 = vld [vmem:[%s769 + $0xf2] sm:$0xff]
    %v1297 = vld [vmem:[%s769 + $0xfa] sm:$0xff]
    %v1298 = vld [vmem:[%s769 + $0x10a] sm:$0xff]
    %v1299 = vld [vmem:[%s769 + $0x112] sm:$0xff]
    %v1300 = vld [vmem:[%s769 + $0x122] sm:$0xff]
    %v1301 = vld [vmem:[%s769 + $0x12a] sm:$0xff]
    %v1302 = vld [vmem:[%s769 + $0x13a] sm:$0xff]
    %v1303 = vld [vmem:[%s769 + $0x142] sm:$0xff]
    %v1304 = vld [vmem:[%s769 + $0x152] sm:$0xff]
    %v1305 = vld [vmem:[%s769 + $0x15a] sm:$0xff]
    %v1306 = vld [vmem:[%s769 + $0x16a] sm:$0xff]
    %v1307 = vld [vmem:[%s769 + $0x172] sm:$0xff]
    %v1308 = vld [vmem:[%s769 + $0x1b2] sm:$0xff]
    %v1309 = vld [vmem:[%s769 + $0x1ba] sm:$0xff]
    %v1310 = vld [vmem:[%s769 + $0x1ca] sm:$0xff]
    %v1311 = vld [vmem:[%s769 + $0x1d2] sm:$0xff]
    %v1312 = vld [vmem:[%s769 + $0x1e2] sm:$0xff]
    %v1313 = vld [vmem:[%s769 + $0x1ea] sm:$0xff]
    %v1314 = vld [vmem:[%s769 + $0x1fa] sm:$0xff]
    %v1315 = vld [vmem:[%s769 + $0x202] sm:$0xff]
    %v1316 = vld [vmem:[%s769 + $0x212] sm:$0xff]
    %v1317 = vld [vmem:[%s769 + $0x21a] sm:$0xff]
    %v1318 = vld [vmem:[%s769 + $0x22a] sm:$0xff]
    %v1319 = vld [vmem:[%s769 + $0x232] sm:$0xff]
    %v1320 = vld [vmem:[%s769 + $0x242] sm:$0xff]
    %v1321 = vld [vmem:[%s769 + $0x24a] sm:$0xff]
    %v1322 = vld [vmem:[%s769 + $0x25a] sm:$0xff]
    %v1323 = vld [vmem:[%s769 + $0x262] sm:$0xff]
    %v1324 = vld [vmem:[%s769 + $0x272] sm:$0xff]
    %v1325 = vld [vmem:[%s769 + $0x27a] sm:$0xff]
    %v1326 = vld [vmem:[%s769 + $0x28a] sm:$0xff]
    %v1327 = vld [vmem:[%s769 + $0x292] sm:$0xff]
    %v1328 = vld [vmem:[%s769 + $0x2a2] sm:$0xff]
    %v1329 = vld [vmem:[%s769 + $0x2aa] sm:$0xff]
    %v1330 = vld [vmem:[%s769 + $0x2ba] sm:$0xff]
    %v1331 = vld [vmem:[%s769 + $0x2c2] sm:$0xff]
    %v1332 = vld [vmem:[%s769 + $0x2d2] sm:$0xff]
    %v1333 = vld [vmem:[%s769 + $0x2da] sm:$0xff]
    %v1334 = vld [vmem:[%s769 + $0x2ea] sm:$0xff]
    %v1335 = vld [vmem:[%s769 + $0x2f2] sm:$0xff]
    %v1336 = vld [vmem:[%s769 + $0x302] sm:$0xff]
    %v1337 = vld [vmem:[%s769 + $0x30a] sm:$0xff]
    %v1338 = vld [vmem:[%s769 + $0x31a] sm:$0xff]
    %v1339 = vld [vmem:[%s769 + $0x322] sm:$0xff]
    %v1340 = vpack.c.bf16 %v1277, %v1276
    %v1341 = vpack.c.bf16 %v1279, %v1278
    %v1342 = vpack.c.bf16 %v1281, %v1280
    %v1343 = vpack.c.bf16 %v1283, %v1282
    %v1344 = vpack.c.bf16 %v1285, %v1284
    %v1345 = vpack.c.bf16 %v1287, %v1286
    %v1346 = vpack.c.bf16 %v1289, %v1288
    %v1347 = vpack.c.bf16 %v1291, %v1290
    %v1348 = vpack.c.bf16 %v1293, %v1292
    %v1349 = vpack.c.bf16 %v1295, %v1294
    %v1350 = vpack.c.bf16 %v1297, %v1296
    %v1351 = vpack.c.bf16 %v1299, %v1298
    %v1352 = vpack.c.bf16 %v1301, %v1300
    %v1353 = vpack.c.bf16 %v1303, %v1302
    %v1354 = vpack.c.bf16 %v1305, %v1304
    %v1355 = vpack.c.bf16 %v1307, %v1306
    %v1356 = vpack.c.bf16 %v1309, %v1308
    %v1357 = vpack.c.bf16 %v1311, %v1310
    %v1358 = vpack.c.bf16 %v1313, %v1312
    %v1359 = vpack.c.bf16 %v1315, %v1314
    %v1360 = vpack.c.bf16 %v1317, %v1316
    %v1361 = vpack.c.bf16 %v1319, %v1318
    %v1362 = vpack.c.bf16 %v1321, %v1320
    %v1363 = vpack.c.bf16 %v1323, %v1322
    %v1364 = vpack.c.bf16 %v1325, %v1324
    %v1365 = vpack.c.bf16 %v1327, %v1326
    %v1366 = vpack.c.bf16 %v1329, %v1328
    %v1367 = vpack.c.bf16 %v1331, %v1330
    %v1368 = vpack.c.bf16 %v1333, %v1332
    %v1369 = vpack.c.bf16 %v1335, %v1334
    %v1370 = vpack.c.bf16 %v1337, %v1336
    %v1371 = vpack.c.bf16 %v1339, %v1338
    %s1372 = scalar_lea.vmem %s1, 20
    %v1373 = vld [vmem:[%s1372] sm:$0xf]
    %v1375 = vsel %vm213, %v1373, 0
    %v1378 = vsel %vm213, %v1340, 0
    %v1381 = vsel %vm213, %v1341, 0
    %v1384 = vsel %vm213, %v1342, 0
    %v1387 = vsel %vm213, %v1343, 0
    %v1390 = vsel %vm213, %v1344, 0
    %v1393 = vsel %vm213, %v1345, 0
    %v1396 = vsel %vm213, %v1346, 0
    %v1399 = vsel %vm213, %v1347, 0
    %v1402 = vsel %vm213, %v1348, 0
    %v1405 = vsel %vm213, %v1349, 0
    %v1408 = vsel %vm213, %v1350, 0
    %v1411 = vsel %vm213, %v1351, 0
    %v1414 = vsel %vm213, %v1352, 0
    %v1417 = vsel %vm213, %v1353, 0
    %v1420 = vsel %vm213, %v1354, 0
    %v1423 = vsel %vm213, %v1355, 0
    %v1426 = vsel %vm213, %v1356, 0
    %v1429 = vsel %vm213, %v1357, 0
    %v1432 = vsel %vm213, %v1358, 0
    %v1435 = vsel %vm213, %v1359, 0
    %v1438 = vsel %vm213, %v1360, 0
    %v1441 = vsel %vm213, %v1361, 0
    %v1444 = vsel %vm213, %v1362, 0
    %v1447 = vsel %vm213, %v1363, 0
    %v1450 = vsel %vm213, %v1364, 0
    %v1453 = vsel %vm213, %v1365, 0
    %v1456 = vsel %vm213, %v1366, 0
    %v1459 = vsel %vm213, %v1367, 0
    %v1462 = vsel %vm213, %v1368, 0
    %v1465 = vsel %vm213, %v1369, 0
    %v1468 = vsel %vm213, %v1370, 0
    %v1471 = vsel %vm213, %v1371, 0
    %1473 = vmatpush.bf16.xpose.msra.mxu0 %v1399
    %1474 = vmatpush.bf16.xpose.msra.mxu0 %v1396
    %1475 = vmatpush.bf16.xpose.msra.mxu0 %v1393
    %1476 = vmatpush.bf16.xpose.msra.mxu0 %v1390
    %1477 = vmatpush.bf16.xpose.msra.mxu0 %v1387
    %1478 = vmatpush.bf16.xpose.msra.mxu0 %v1384
    %1479 = vmatpush.bf16.xpose.msra.mxu0 %v1381
    %1480 = vmatpush.bf16.xpose.msra.mxu0 %v1378
    %1481 = vmatmul.bf16.gmra.mxu0 %v1375
    %v1482 = vpop.f32.mrf.mxu0
    %v1483 = vadd.f32 0.0, %v1482
    %v1484 = vpop.f32.mrf.mxu0
    %1485 = vdwg.mxu0
    %1486 = vmatpush.bf16.xpose.msra.mxu0 %v1423
    %1487 = vmatpush.bf16.xpose.msra.mxu0 %v1420
    %1488 = vmatpush.bf16.xpose.msra.mxu0 %v1417
    %1489 = vmatpush.bf16.xpose.msra.mxu0 %v1414
    %1490 = vmatpush.bf16.xpose.msra.mxu0 %v1411
    %1491 = vmatpush.bf16.xpose.msra.mxu0 %v1408
    %1492 = vmatpush.bf16.xpose.msra.mxu0 %v1405
    %1493 = vmatpush.bf16.xpose.msra.mxu0 %v1402
    %1494 = vmatmul.bf16.gmra.mxu0 %v1375
    %v1495 = vpop.f32.mrf.mxu0
    %v1496 = vadd.f32 0.0, %v1495
    %v1497 = vpop.f32.mrf.mxu0
    %1498 = vdwg.mxu0
    %1499 = vmatpush.bf16.xpose.msra.mxu0 %v1447
    %1500 = vmatpush.bf16.xpose.msra.mxu0 %v1444
    %1501 = vmatpush.bf16.xpose.msra.mxu0 %v1441
    %1502 = vmatpush.bf16.xpose.msra.mxu0 %v1438
    %1503 = vmatpush.bf16.xpose.msra.mxu0 %v1435
    %1504 = vmatpush.bf16.xpose.msra.mxu0 %v1432
    %1505 = vmatpush.bf16.xpose.msra.mxu0 %v1429
    %1506 = vmatpush.bf16.xpose.msra.mxu0 %v1426
    %1507 = vmatmul.bf16.gmra.mxu0 %v1375
    %v1508 = vpop.f32.mrf.mxu0
    %v1509 = vadd.f32 0.0, %v1508
    %v1510 = vpop.f32.mrf.mxu0
    %1511 = vdwg.mxu0
    %1512 = vmatpush.bf16.xpose.msra.mxu0 %v1471
    %1513 = vmatpush.bf16.xpose.msra.mxu0 %v1468
    %1514 = vmatpush.bf16.xpose.msra.mxu0 %v1465
    %1515 = vmatpush.bf16.xpose.msra.mxu0 %v1462
    %1516 = vmatpush.bf16.xpose.msra.mxu0 %v1459
    %1517 = vmatpush.bf16.xpose.msra.mxu0 %v1456
    %1518 = vmatpush.bf16.xpose.msra.mxu0 %v1453
    %1519 = vmatpush.bf16.xpose.msra.mxu0 %v1450
    %1520 = vmatmul.bf16.gmra.mxu0 %v1375
    %v1521 = vpop.f32.mrf.mxu0
    %v1522 = vadd.f32 0.0, %v1521
    %v1523 = vpop.f32.mrf.mxu0
    %1524 = vdwg.mxu0
    %v1525 = vadd.f32 %v1272, %v1483
    %v1526 = vadd.f32 %v1273, %v1496
    %v1527 = vadd.f32 %v1274, %v1509
    %v1528 = vadd.f32 %v1275, %v1522
    %s1529 = scalar_lea.vmem %s0, 48
    %v1530 = vld [vmem:[%s1529] sm:$0xff]
    %v1531 = vld [vmem:[%s1529 + $0x8] sm:$0xff]
    %v1532 = vld [vmem:[%s1529 + $0x18] sm:$0xff]
    %v1533 = vld [vmem:[%s1529 + $0x20] sm:$0xff]
    %v1534 = vld [vmem:[%s1529 + $0x30] sm:$0xff]
    %v1535 = vld [vmem:[%s1529 + $0x38] sm:$0xff]
    %v1536 = vld [vmem:[%s1529 + $0x48] sm:$0xff]
    %v1537 = vld [vmem:[%s1529 + $0x50] sm:$0xff]
    %v1538 = vld [vmem:[%s1529 + $0x60] sm:$0xff]
    %v1539 = vld [vmem:[%s1529 + $0x68] sm:$0xff]
    %v1540 = vld [vmem:[%s1529 + $0x78] sm:$0xff]
    %v1541 = vld [vmem:[%s1529 + $0x80] sm:$0xff]
    %v1542 = vld [vmem:[%s1529 + $0x90] sm:$0xff]
    %v1543 = vld [vmem:[%s1529 + $0x98] sm:$0xff]
    %v1544 = vld [vmem:[%s1529 + $0xa8] sm:$0xff]
    %v1545 = vld [vmem:[%s1529 + $0xb0] sm:$0xff]
    %v1546 = vld [vmem:[%s1529 + $0xc0] sm:$0xff]
    %v1547 = vld [vmem:[%s1529 + $0xc8] sm:$0xff]
    %v1548 = vld [vmem:[%s1529 + $0xd8] sm:$0xff]
    %v1549 = vld [vmem:[%s1529 + $0xe0] sm:$0xff]
    %v1550 = vld [vmem:[%s1529 + $0xf0] sm:$0xff]
    %v1551 = vld [vmem:[%s1529 + $0xf8] sm:$0xff]
    %v1552 = vld [vmem:[%s1529 + $0x108] sm:$0xff]
    %v1553 = vld [vmem:[%s1529 + $0x110] sm:$0xff]
    %v1554 = vld [vmem:[%s1529 + $0x120] sm:$0xff]
    %v1555 = vld [vmem:[%s1529 + $0x128] sm:$0xff]
    %v1556 = vld [vmem:[%s1529 + $0x138] sm:$0xff]
    %v1557 = vld [vmem:[%s1529 + $0x140] sm:$0xff]
    %v1558 = vld [vmem:[%s1529 + $0x150] sm:$0xff]
    %v1559 = vld [vmem:[%s1529 + $0x158] sm:$0xff]
    %v1560 = vld [vmem:[%s1529 + $0x168] sm:$0xff]
    %v1561 = vld [vmem:[%s1529 + $0x170] sm:$0xff]
    %v1562 = vld [vmem:[%s1529 + $0x1b0] sm:$0xff]
    %v1563 = vld [vmem:[%s1529 + $0x1b8] sm:$0xff]
    %v1564 = vld [vmem:[%s1529 + $0x1c8] sm:$0xff]
    %v1565 = vld [vmem:[%s1529 + $0x1d0] sm:$0xff]
    %v1566 = vld [vmem:[%s1529 + $0x1e0] sm:$0xff]
    %v1567 = vld [vmem:[%s1529 + $0x1e8] sm:$0xff]
    %v1568 = vld [vmem:[%s1529 + $0x1f8] sm:$0xff]
    %v1569 = vld [vmem:[%s1529 + $0x200] sm:$0xff]
    %v1570 = vld [vmem:[%s1529 + $0x210] sm:$0xff]
    %v1571 = vld [vmem:[%s1529 + $0x218] sm:$0xff]
    %v1572 = vld [vmem:[%s1529 + $0x228] sm:$0xff]
    %v1573 = vld [vmem:[%s1529 + $0x230] sm:$0xff]
    %v1574 = vld [vmem:[%s1529 + $0x240] sm:$0xff]
    %v1575 = vld [vmem:[%s1529 + $0x248] sm:$0xff]
    %v1576 = vld [vmem:[%s1529 + $0x258] sm:$0xff]
    %v1577 = vld [vmem:[%s1529 + $0x260] sm:$0xff]
    %v1578 = vld [vmem:[%s1529 + $0x270] sm:$0xff]
    %v1579 = vld [vmem:[%s1529 + $0x278] sm:$0xff]
    %v1580 = vld [vmem:[%s1529 + $0x288] sm:$0xff]
    %v1581 = vld [vmem:[%s1529 + $0x290] sm:$0xff]
    %v1582 = vld [vmem:[%s1529 + $0x2a0] sm:$0xff]
    %v1583 = vld [vmem:[%s1529 + $0x2a8] sm:$0xff]
    %v1584 = vld [vmem:[%s1529 + $0x2b8] sm:$0xff]
    %v1585 = vld [vmem:[%s1529 + $0x2c0] sm:$0xff]
    %v1586 = vld [vmem:[%s1529 + $0x2d0] sm:$0xff]
    %v1587 = vld [vmem:[%s1529 + $0x2d8] sm:$0xff]
    %v1588 = vld [vmem:[%s1529 + $0x2e8] sm:$0xff]
    %v1589 = vld [vmem:[%s1529 + $0x2f0] sm:$0xff]
    %v1590 = vld [vmem:[%s1529 + $0x300] sm:$0xff]
    %v1591 = vld [vmem:[%s1529 + $0x308] sm:$0xff]
    %v1592 = vld [vmem:[%s1529 + $0x318] sm:$0xff]
    %v1593 = vld [vmem:[%s1529 + $0x320] sm:$0xff]
    %v1594 = vpack.c.bf16 %v1531, %v1530
    %v1595 = vpack.c.bf16 %v1533, %v1532
    %v1596 = vpack.c.bf16 %v1535, %v1534
    %v1597 = vpack.c.bf16 %v1537, %v1536
    %v1598 = vpack.c.bf16 %v1539, %v1538
    %v1599 = vpack.c.bf16 %v1541, %v1540
    %v1600 = vpack.c.bf16 %v1543, %v1542
    %v1601 = vpack.c.bf16 %v1545, %v1544
    %v1602 = vpack.c.bf16 %v1547, %v1546
    %v1603 = vpack.c.bf16 %v1549, %v1548
    %v1604 = vpack.c.bf16 %v1551, %v1550
    %v1605 = vpack.c.bf16 %v1553, %v1552
    %v1606 = vpack.c.bf16 %v1555, %v1554
    %v1607 = vpack.c.bf16 %v1557, %v1556
    %v1608 = vpack.c.bf16 %v1559, %v1558
    %v1609 = vpack.c.bf16 %v1561, %v1560
    %v1610 = vpack.c.bf16 %v1563, %v1562
    %v1611 = vpack.c.bf16 %v1565, %v1564
    %v1612 = vpack.c.bf16 %v1567, %v1566
    %v1613 = vpack.c.bf16 %v1569, %v1568
    %v1614 = vpack.c.bf16 %v1571, %v1570
    %v1615 = vpack.c.bf16 %v1573, %v1572
    %v1616 = vpack.c.bf16 %v1575, %v1574
    %v1617 = vpack.c.bf16 %v1577, %v1576
    %v1618 = vpack.c.bf16 %v1579, %v1578
    %v1619 = vpack.c.bf16 %v1581, %v1580
    %v1620 = vpack.c.bf16 %v1583, %v1582
    %v1621 = vpack.c.bf16 %v1585, %v1584
    %v1622 = vpack.c.bf16 %v1587, %v1586
    %v1623 = vpack.c.bf16 %v1589, %v1588
    %v1624 = vpack.c.bf16 %v1591, %v1590
    %v1625 = vpack.c.bf16 %v1593, %v1592
    %s1626 = scalar_lea.vmem %s1, 24
    %v1627 = vld [vmem:[%s1626] sm:$0xf]
    %v1629 = vsel %vm213, %v1627, 0
    %v1632 = vsel %vm213, %v1594, 0
    %v1635 = vsel %vm213, %v1595, 0
    %v1638 = vsel %vm213, %v1596, 0
    %v1641 = vsel %vm213, %v1597, 0
    %v1644 = vsel %vm213, %v1598, 0
    %v1647 = vsel %vm213, %v1599, 0
    %v1650 = vsel %vm213, %v1600, 0
    %v1653 = vsel %vm213, %v1601, 0
    %v1656 = vsel %vm213, %v1602, 0
    %v1659 = vsel %vm213, %v1603, 0
    %v1662 = vsel %vm213, %v1604, 0
    %v1665 = vsel %vm213, %v1605, 0
    %v1668 = vsel %vm213, %v1606, 0
    %v1671 = vsel %vm213, %v1607, 0
    %v1674 = vsel %vm213, %v1608, 0
    %v1677 = vsel %vm213, %v1609, 0
    %v1680 = vsel %vm213, %v1610, 0
    %v1683 = vsel %vm213, %v1611, 0
    %v1686 = vsel %vm213, %v1612, 0
    %v1689 = vsel %vm213, %v1613, 0
    %v1692 = vsel %vm213, %v1614, 0
    %v1695 = vsel %vm213, %v1615, 0
    %v1698 = vsel %vm213, %v1616, 0
    %v1701 = vsel %vm213, %v1617, 0
    %v1704 = vsel %vm213, %v1618, 0
    %v1707 = vsel %vm213, %v1619, 0
    %v1710 = vsel %vm213, %v1620, 0
    %v1713 = vsel %vm213, %v1621, 0
    %v1716 = vsel %vm213, %v1622, 0
    %v1719 = vsel %vm213, %v1623, 0
    %v1722 = vsel %vm213, %v1624, 0
    %v1725 = vsel %vm213, %v1625, 0
    %1727 = vmatpush.bf16.xpose.msra.mxu0 %v1653
    %1728 = vmatpush.bf16.xpose.msra.mxu0 %v1650
    %1729 = vmatpush.bf16.xpose.msra.mxu0 %v1647
    %1730 = vmatpush.bf16.xpose.msra.mxu0 %v1644
    %1731 = vmatpush.bf16.xpose.msra.mxu0 %v1641
    %1732 = vmatpush.bf16.xpose.msra.mxu0 %v1638
    %1733 = vmatpush.bf16.xpose.msra.mxu0 %v1635
    %1734 = vmatpush.bf16.xpose.msra.mxu0 %v1632
    %1735 = vmatmul.bf16.gmra.mxu0 %v1629
    %v1736 = vpop.f32.mrf.mxu0
    %v1737 = vadd.f32 0.0, %v1736
    %v1738 = vpop.f32.mrf.mxu0
    %1739 = vdwg.mxu0
    %1740 = vmatpush.bf16.xpose.msra.mxu0 %v1677
    %1741 = vmatpush.bf16.xpose.msra.mxu0 %v1674
    %1742 = vmatpush.bf16.xpose.msra.mxu0 %v1671
    %1743 = vmatpush.bf16.xpose.msra.mxu0 %v1668
    %1744 = vmatpush.bf16.xpose.msra.mxu0 %v1665
    %1745 = vmatpush.bf16.xpose.msra.mxu0 %v1662
    %1746 = vmatpush.bf16.xpose.msra.mxu0 %v1659
    %1747 = vmatpush.bf16.xpose.msra.mxu0 %v1656
    %1748 = vmatmul.bf16.gmra.mxu0 %v1629
    %v1749 = vpop.f32.mrf.mxu0
    %v1750 = vadd.f32 0.0, %v1749
    %v1751 = vpop.f32.mrf.mxu0
    %1752 = vdwg.mxu0
    %1753 = vmatpush.bf16.xpose.msra.mxu0 %v1701
    %1754 = vmatpush.bf16.xpose.msra.mxu0 %v1698
    %1755 = vmatpush.bf16.xpose.msra.mxu0 %v1695
    %1756 = vmatpush.bf16.xpose.msra.mxu0 %v1692
    %1757 = vmatpush.bf16.xpose.msra.mxu0 %v1689
    %1758 = vmatpush.bf16.xpose.msra.mxu0 %v1686
    %1759 = vmatpush.bf16.xpose.msra.mxu0 %v1683
    %1760 = vmatpush.bf16.xpose.msra.mxu0 %v1680
    %1761 = vmatmul.bf16.gmra.mxu0 %v1629
    %v1762 = vpop.f32.mrf.mxu0
    %v1763 = vadd.f32 0.0, %v1762
    %v1764 = vpop.f32.mrf.mxu0
    %1765 = vdwg.mxu0
    %1766 = vmatpush.bf16.xpose.msra.mxu0 %v1725
    %1767 = vmatpush.bf16.xpose.msra.mxu0 %v1722
    %1768 = vmatpush.bf16.xpose.msra.mxu0 %v1719
    %1769 = vmatpush.bf16.xpose.msra.mxu0 %v1716
    %1770 = vmatpush.bf16.xpose.msra.mxu0 %v1713
    %1771 = vmatpush.bf16.xpose.msra.mxu0 %v1710
    %1772 = vmatpush.bf16.xpose.msra.mxu0 %v1707
    %1773 = vmatpush.bf16.xpose.msra.mxu0 %v1704
    %1774 = vmatmul.bf16.gmra.mxu0 %v1629
    %v1775 = vpop.f32.mrf.mxu0
    %v1776 = vadd.f32 0.0, %v1775
    %v1777 = vpop.f32.mrf.mxu0
    %1778 = vdwg.mxu0
    %v1779 = vadd.f32 %v1525, %v1737
    %v1780 = vadd.f32 %v1526, %v1750
    %v1781 = vadd.f32 %v1527, %v1763
    %v1782 = vadd.f32 %v1528, %v1776
    %v1783 = vld [vmem:[%s1529 + $0x1] sm:$0xff]
    %v1784 = vld [vmem:[%s1529 + $0x9] sm:$0xff]
    %v1785 = vld [vmem:[%s1529 + $0x19] sm:$0xff]
    %v1786 = vld [vmem:[%s1529 + $0x21] sm:$0xff]
    %v1787 = vld [vmem:[%s1529 + $0x31] sm:$0xff]
    %v1788 = vld [vmem:[%s1529 + $0x39] sm:$0xff]
    %v1789 = vld [vmem:[%s1529 + $0x49] sm:$0xff]
    %v1790 = vld [vmem:[%s1529 + $0x51] sm:$0xff]
    %v1791 = vld [vmem:[%s1529 + $0x61] sm:$0xff]
    %v1792 = vld [vmem:[%s1529 + $0x69] sm:$0xff]
    %v1793 = vld [vmem:[%s1529 + $0x79] sm:$0xff]
    %v1794 = vld [vmem:[%s1529 + $0x81] sm:$0xff]
    %v1795 = vld [vmem:[%s1529 + $0x91] sm:$0xff]
    %v1796 = vld [vmem:[%s1529 + $0x99] sm:$0xff]
    %v1797 = vld [vmem:[%s1529 + $0xa9] sm:$0xff]
    %v1798 = vld [vmem:[%s1529 + $0xb1] sm:$0xff]
    %v1799 = vld [vmem:[%s1529 + $0xc1] sm:$0xff]
    %v1800 = vld [vmem:[%s1529 + $0xc9] sm:$0xff]
    %v1801 = vld [vmem:[%s1529 + $0xd9] sm:$0xff]
    %v1802 = vld [vmem:[%s1529 + $0xe1] sm:$0xff]
    %v1803 = vld [vmem:[%s1529 + $0xf1] sm:$0xff]
    %v1804 = vld [vmem:[%s1529 + $0xf9] sm:$0xff]
    %v1805 = vld [vmem:[%s1529 + $0x109] sm:$0xff]
    %v1806 = vld [vmem:[%s1529 + $0x111] sm:$0xff]
    %v1807 = vld [vmem:[%s1529 + $0x121] sm:$0xff]
    %v1808 = vld [vmem:[%s1529 + $0x129] sm:$0xff]
    %v1809 = vld [vmem:[%s1529 + $0x139] sm:$0xff]
    %v1810 = vld [vmem:[%s1529 + $0x141] sm:$0xff]
    %v1811 = vld [vmem:[%s1529 + $0x151] sm:$0xff]
    %v1812 = vld [vmem:[%s1529 + $0x159] sm:$0xff]
    %v1813 = vld [vmem:[%s1529 + $0x169] sm:$0xff]
    %v1814 = vld [vmem:[%s1529 + $0x171] sm:$0xff]
    %v1815 = vld [vmem:[%s1529 + $0x1b1] sm:$0xff]
    %v1816 = vld [vmem:[%s1529 + $0x1b9] sm:$0xff]
    %v1817 = vld [vmem:[%s1529 + $0x1c9] sm:$0xff]
    %v1818 = vld [vmem:[%s1529 + $0x1d1] sm:$0xff]
    %v1819 = vld [vmem:[%s1529 + $0x1e1] sm:$0xff]
    %v1820 = vld [vmem:[%s1529 + $0x1e9] sm:$0xff]
    %v1821 = vld [vmem:[%s1529 + $0x1f9] sm:$0xff]
    %v1822 = vld [vmem:[%s1529 + $0x201] sm:$0xff]
    %v1823 = vld [vmem:[%s1529 + $0x211] sm:$0xff]
    %v1824 = vld [vmem:[%s1529 + $0x219] sm:$0xff]
    %v1825 = vld [vmem:[%s1529 + $0x229] sm:$0xff]
    %v1826 = vld [vmem:[%s1529 + $0x231] sm:$0xff]
    %v1827 = vld [vmem:[%s1529 + $0x241] sm:$0xff]
    %v1828 = vld [vmem:[%s1529 + $0x249] sm:$0xff]
    %v1829 = vld [vmem:[%s1529 + $0x259] sm:$0xff]
    %v1830 = vld [vmem:[%s1529 + $0x261] sm:$0xff]
    %v1831 = vld [vmem:[%s1529 + $0x271] sm:$0xff]
    %v1832 = vld [vmem:[%s1529 + $0x279] sm:$0xff]
    %v1833 = vld [vmem:[%s1529 + $0x289] sm:$0xff]
    %v1834 = vld [vmem:[%s1529 + $0x291] sm:$0xff]
    %v1835 = vld [vmem:[%s1529 + $0x2a1] sm:$0xff]
    %v1836 = vld [vmem:[%s1529 + $0x2a9] sm:$0xff]
    %v1837 = vld [vmem:[%s1529 + $0x2b9] sm:$0xff]
    %v1838 = vld [vmem:[%s1529 + $0x2c1] sm:$0xff]
    %v1839 = vld [vmem:[%s1529 + $0x2d1] sm:$0xff]
    %v1840 = vld [vmem:[%s1529 + $0x2d9] sm:$0xff]
    %v1841 = vld [vmem:[%s1529 + $0x2e9] sm:$0xff]
    %v1842 = vld [vmem:[%s1529 + $0x2f1] sm:$0xff]
    %v1843 = vld [vmem:[%s1529 + $0x301] sm:$0xff]
    %v1844 = vld [vmem:[%s1529 + $0x309] sm:$0xff]
    %v1845 = vld [vmem:[%s1529 + $0x319] sm:$0xff]
    %v1846 = vld [vmem:[%s1529 + $0x321] sm:$0xff]
    %v1847 = vpack.c.bf16 %v1784, %v1783
    %v1848 = vpack.c.bf16 %v1786, %v1785
    %v1849 = vpack.c.bf16 %v1788, %v1787
    %v1850 = vpack.c.bf16 %v1790, %v1789
    %v1851 = vpack.c.bf16 %v1792, %v1791
    %v1852 = vpack.c.bf16 %v1794, %v1793
    %v1853 = vpack.c.bf16 %v1796, %v1795
    %v1854 = vpack.c.bf16 %v1798, %v1797
    %v1855 = vpack.c.bf16 %v1800, %v1799
    %v1856 = vpack.c.bf16 %v1802, %v1801
    %v1857 = vpack.c.bf16 %v1804, %v1803
    %v1858 = vpack.c.bf16 %v1806, %v1805
    %v1859 = vpack.c.bf16 %v1808, %v1807
    %v1860 = vpack.c.bf16 %v1810, %v1809
    %v1861 = vpack.c.bf16 %v1812, %v1811
    %v1862 = vpack.c.bf16 %v1814, %v1813
    %v1863 = vpack.c.bf16 %v1816, %v1815
    %v1864 = vpack.c.bf16 %v1818, %v1817
    %v1865 = vpack.c.bf16 %v1820, %v1819
    %v1866 = vpack.c.bf16 %v1822, %v1821
    %v1867 = vpack.c.bf16 %v1824, %v1823
    %v1868 = vpack.c.bf16 %v1826, %v1825
    %v1869 = vpack.c.bf16 %v1828, %v1827
    %v1870 = vpack.c.bf16 %v1830, %v1829
    %v1871 = vpack.c.bf16 %v1832, %v1831
    %v1872 = vpack.c.bf16 %v1834, %v1833
    %v1873 = vpack.c.bf16 %v1836, %v1835
    %v1874 = vpack.c.bf16 %v1838, %v1837
    %v1875 = vpack.c.bf16 %v1840, %v1839
    %v1876 = vpack.c.bf16 %v1842, %v1841
    %v1877 = vpack.c.bf16 %v1844, %v1843
    %v1878 = vpack.c.bf16 %v1846, %v1845
    %s1879 = scalar_lea.vmem %s1, 28
    %v1880 = vld [vmem:[%s1879] sm:$0xf]
    %v1882 = vsel %vm213, %v1880, 0
    %v1885 = vsel %vm213, %v1847, 0
    %v1888 = vsel %vm213, %v1848, 0
    %v1891 = vsel %vm213, %v1849, 0
    %v1894 = vsel %vm213, %v1850, 0
    %v1897 = vsel %vm213, %v1851, 0
    %v1900 = vsel %vm213, %v1852, 0
    %v1903 = vsel %vm213, %v1853, 0
    %v1906 = vsel %vm213, %v1854, 0
    %v1909 = vsel %vm213, %v1855, 0
    %v1912 = vsel %vm213, %v1856, 0
    %v1915 = vsel %vm213, %v1857, 0
    %v1918 = vsel %vm213, %v1858, 0
    %v1921 = vsel %vm213, %v1859, 0
    %v1924 = vsel %vm213, %v1860, 0
    %v1927 = vsel %vm213, %v1861, 0
    %v1930 = vsel %vm213, %v1862, 0
    %v1933 = vsel %vm213, %v1863, 0
    %v1936 = vsel %vm213, %v1864, 0
    %v1939 = vsel %vm213, %v1865, 0
    %v1942 = vsel %vm213, %v1866, 0
    %v1945 = vsel %vm213, %v1867, 0
    %v1948 = vsel %vm213, %v1868, 0
    %v1951 = vsel %vm213, %v1869, 0
    %v1954 = vsel %vm213, %v1870, 0
    %v1957 = vsel %vm213, %v1871, 0
    %v1960 = vsel %vm213, %v1872, 0
    %v1963 = vsel %vm213, %v1873, 0
    %v1966 = vsel %vm213, %v1874, 0
    %v1969 = vsel %vm213, %v1875, 0
    %v1972 = vsel %vm213, %v1876, 0
    %v1975 = vsel %vm213, %v1877, 0
    %v1978 = vsel %vm213, %v1878, 0
    %1980 = vmatpush.bf16.xpose.msra.mxu0 %v1906
    %1981 = vmatpush.bf16.xpose.msra.mxu0 %v1903
    %1982 = vmatpush.bf16.xpose.msra.mxu0 %v1900
    %1983 = vmatpush.bf16.xpose.msra.mxu0 %v1897
    %1984 = vmatpush.bf16.xpose.msra.mxu0 %v1894
    %1985 = vmatpush.bf16.xpose.msra.mxu0 %v1891
    %1986 = vmatpush.bf16.xpose.msra.mxu0 %v1888
    %1987 = vmatpush.bf16.xpose.msra.mxu0 %v1885
    %1988 = vmatmul.bf16.gmra.mxu0 %v1882
    %v1989 = vpop.f32.mrf.mxu0
    %v1990 = vadd.f32 0.0, %v1989
    %v1991 = vpop.f32.mrf.mxu0
    %1992 = vdwg.mxu0
    %1993 = vmatpush.bf16.xpose.msra.mxu0 %v1930
    %1994 = vmatpush.bf16.xpose.msra.mxu0 %v1927
    %1995 = vmatpush.bf16.xpose.msra.mxu0 %v1924
    %1996 = vmatpush.bf16.xpose.msra.mxu0 %v1921
    %1997 = vmatpush.bf16.xpose.msra.mxu0 %v1918
    %1998 = vmatpush.bf16.xpose.msra.mxu0 %v1915
    %1999 = vmatpush.bf16.xpose.msra.mxu0 %v1912
    %2000 = vmatpush.bf16.xpose.msra.mxu0 %v1909
    %2001 = vmatmul.bf16.gmra.mxu0 %v1882
    %v2002 = vpop.f32.mrf.mxu0
    %v2003 = vadd.f32 0.0, %v2002
    %v2004 = vpop.f32.mrf.mxu0
    %2005 = vdwg.mxu0
    %2006 = vmatpush.bf16.xpose.msra.mxu0 %v1954
    %2007 = vmatpush.bf16.xpose.msra.mxu0 %v1951
    %2008 = vmatpush.bf16.xpose.msra.mxu0 %v1948
    %2009 = vmatpush.bf16.xpose.msra.mxu0 %v1945
    %2010 = vmatpush.bf16.xpose.msra.mxu0 %v1942
    %2011 = vmatpush.bf16.xpose.msra.mxu0 %v1939
    %2012 = vmatpush.bf16.xpose.msra.mxu0 %v1936
    %2013 = vmatpush.bf16.xpose.msra.mxu0 %v1933
    %2014 = vmatmul.bf16.gmra.mxu0 %v1882
    %v2015 = vpop.f32.mrf.mxu0
    %v2016 = vadd.f32 0.0, %v2015
    %v2017 = vpop.f32.mrf.mxu0
    %2018 = vdwg.mxu0
    %2019 = vmatpush.bf16.xpose.msra.mxu0 %v1978
    %2020 = vmatpush.bf16.xpose.msra.mxu0 %v1975
    %2021 = vmatpush.bf16.xpose.msra.mxu0 %v1972
    %2022 = vmatpush.bf16.xpose.msra.mxu0 %v1969
    %2023 = vmatpush.bf16.xpose.msra.mxu0 %v1966
    %2024 = vmatpush.bf16.xpose.msra.mxu0 %v1963
    %2025 = vmatpush.bf16.xpose.msra.mxu0 %v1960
    %2026 = vmatpush.bf16.xpose.msra.mxu0 %v1957
    %2027 = vmatmul.bf16.gmra.mxu0 %v1882
    %v2028 = vpop.f32.mrf.mxu0
    %v2029 = vadd.f32 0.0, %v2028
    %v2030 = vpop.f32.mrf.mxu0
    %2031 = vdwg.mxu0
    %v2032 = vadd.f32 %v1779, %v1990
    %v2033 = vadd.f32 %v1780, %v2003
    %v2034 = vadd.f32 %v1781, %v2016
    %v2035 = vadd.f32 %v1782, %v2029
    %v2036 = vld [vmem:[%s1529 + $0x2] sm:$0xff]
    %v2037 = vld [vmem:[%s1529 + $0xa] sm:$0xff]
    %v2038 = vld [vmem:[%s1529 + $0x1a] sm:$0xff]
    %v2039 = vld [vmem:[%s1529 + $0x22] sm:$0xff]
    %v2040 = vld [vmem:[%s1529 + $0x32] sm:$0xff]
    %v2041 = vld [vmem:[%s1529 + $0x3a] sm:$0xff]
    %v2042 = vld [vmem:[%s1529 + $0x4a] sm:$0xff]
    %v2043 = vld [vmem:[%s1529 + $0x52] sm:$0xff]
    %v2044 = vld [vmem:[%s1529 + $0x62] sm:$0xff]
    %v2045 = vld [vmem:[%s1529 + $0x6a] sm:$0xff]
    %v2046 = vld [vmem:[%s1529 + $0x7a] sm:$0xff]
    %v2047 = vld [vmem:[%s1529 + $0x82] sm:$0xff]
    %v2048 = vld [vmem:[%s1529 + $0x92] sm:$0xff]
    %v2049 = vld [vmem:[%s1529 + $0x9a] sm:$0xff]
    %v2050 = vld [vmem:[%s1529 + $0xaa] sm:$0xff]
    %v2051 = vld [vmem:[%s1529 + $0xb2] sm:$0xff]
    %v2052 = vld [vmem:[%s1529 + $0xc2] sm:$0xff]
    %v2053 = vld [vmem:[%s1529 + $0xca] sm:$0xff]
    %v2054 = vld [vmem:[%s1529 + $0xda] sm:$0xff]
    %v2055 = vld [vmem:[%s1529 + $0xe2] sm:$0xff]
    %v2056 = vld [vmem:[%s1529 + $0xf2] sm:$0xff]
    %v2057 = vld [vmem:[%s1529 + $0xfa] sm:$0xff]
    %v2058 = vld [vmem:[%s1529 + $0x10a] sm:$0xff]
    %v2059 = vld [vmem:[%s1529 + $0x112] sm:$0xff]
    %v2060 = vld [vmem:[%s1529 + $0x122] sm:$0xff]
    %v2061 = vld [vmem:[%s1529 + $0x12a] sm:$0xff]
    %v2062 = vld [vmem:[%s1529 + $0x13a] sm:$0xff]
    %v2063 = vld [vmem:[%s1529 + $0x142] sm:$0xff]
    %v2064 = vld [vmem:[%s1529 + $0x152] sm:$0xff]
    %v2065 = vld [vmem:[%s1529 + $0x15a] sm:$0xff]
    %v2066 = vld [vmem:[%s1529 + $0x16a] sm:$0xff]
    %v2067 = vld [vmem:[%s1529 + $0x172] sm:$0xff]
    %v2068 = vld [vmem:[%s1529 + $0x1b2] sm:$0xff]
    %v2069 = vld [vmem:[%s1529 + $0x1ba] sm:$0xff]
    %v2070 = vld [vmem:[%s1529 + $0x1ca] sm:$0xff]
    %v2071 = vld [vmem:[%s1529 + $0x1d2] sm:$0xff]
    %v2072 = vld [vmem:[%s1529 + $0x1e2] sm:$0xff]
    %v2073 = vld [vmem:[%s1529 + $0x1ea] sm:$0xff]
    %v2074 = vld [vmem:[%s1529 + $0x1fa] sm:$0xff]
    %v2075 = vld [vmem:[%s1529 + $0x202] sm:$0xff]
    %v2076 = vld [vmem:[%s1529 + $0x212] sm:$0xff]
    %v2077 = vld [vmem:[%s1529 + $0x21a] sm:$0xff]
    %v2078 = vld [vmem:[%s1529 + $0x22a] sm:$0xff]
    %v2079 = vld [vmem:[%s1529 + $0x232] sm:$0xff]
    %v2080 = vld [vmem:[%s1529 + $0x242] sm:$0xff]
    %v2081 = vld [vmem:[%s1529 + $0x24a] sm:$0xff]
    %v2082 = vld [vmem:[%s1529 + $0x25a] sm:$0xff]
    %v2083 = vld [vmem:[%s1529 + $0x262] sm:$0xff]
    %v2084 = vld [vmem:[%s1529 + $0x272] sm:$0xff]
    %v2085 = vld [vmem:[%s1529 + $0x27a] sm:$0xff]
    %v2086 = vld [vmem:[%s1529 + $0x28a] sm:$0xff]
    %v2087 = vld [vmem:[%s1529 + $0x292] sm:$0xff]
    %v2088 = vld [vmem:[%s1529 + $0x2a2] sm:$0xff]
    %v2089 = vld [vmem:[%s1529 + $0x2aa] sm:$0xff]
    %v2090 = vld [vmem:[%s1529 + $0x2ba] sm:$0xff]
    %v2091 = vld [vmem:[%s1529 + $0x2c2] sm:$0xff]
    %v2092 = vld [vmem:[%s1529 + $0x2d2] sm:$0xff]
    %v2093 = vld [vmem:[%s1529 + $0x2da] sm:$0xff]
    %v2094 = vld [vmem:[%s1529 + $0x2ea] sm:$0xff]
    %v2095 = vld [vmem:[%s1529 + $0x2f2] sm:$0xff]
    %v2096 = vld [vmem:[%s1529 + $0x302] sm:$0xff]
    %v2097 = vld [vmem:[%s1529 + $0x30a] sm:$0xff]
    %v2098 = vld [vmem:[%s1529 + $0x31a] sm:$0xff]
    %v2099 = vld [vmem:[%s1529 + $0x322] sm:$0xff]
    %v2100 = vpack.c.bf16 %v2037, %v2036
    %v2101 = vpack.c.bf16 %v2039, %v2038
    %v2102 = vpack.c.bf16 %v2041, %v2040
    %v2103 = vpack.c.bf16 %v2043, %v2042
    %v2104 = vpack.c.bf16 %v2045, %v2044
    %v2105 = vpack.c.bf16 %v2047, %v2046
    %v2106 = vpack.c.bf16 %v2049, %v2048
    %v2107 = vpack.c.bf16 %v2051, %v2050
    %v2108 = vpack.c.bf16 %v2053, %v2052
    %v2109 = vpack.c.bf16 %v2055, %v2054
    %v2110 = vpack.c.bf16 %v2057, %v2056
    %v2111 = vpack.c.bf16 %v2059, %v2058
    %v2112 = vpack.c.bf16 %v2061, %v2060
    %v2113 = vpack.c.bf16 %v2063, %v2062
    %v2114 = vpack.c.bf16 %v2065, %v2064
    %v2115 = vpack.c.bf16 %v2067, %v2066
    %v2116 = vpack.c.bf16 %v2069, %v2068
    %v2117 = vpack.c.bf16 %v2071, %v2070
    %v2118 = vpack.c.bf16 %v2073, %v2072
    %v2119 = vpack.c.bf16 %v2075, %v2074
    %v2120 = vpack.c.bf16 %v2077, %v2076
    %v2121 = vpack.c.bf16 %v2079, %v2078
    %v2122 = vpack.c.bf16 %v2081, %v2080
    %v2123 = vpack.c.bf16 %v2083, %v2082
    %v2124 = vpack.c.bf16 %v2085, %v2084
    %v2125 = vpack.c.bf16 %v2087, %v2086
    %v2126 = vpack.c.bf16 %v2089, %v2088
    %v2127 = vpack.c.bf16 %v2091, %v2090
    %v2128 = vpack.c.bf16 %v2093, %v2092
    %v2129 = vpack.c.bf16 %v2095, %v2094
    %v2130 = vpack.c.bf16 %v2097, %v2096
    %v2131 = vpack.c.bf16 %v2099, %v2098
    %s2132 = scalar_lea.vmem %s1, 32
    %v2133 = vld [vmem:[%s2132] sm:$0xf]
    %v2135 = vsel %vm213, %v2133, 0
    %v2138 = vsel %vm213, %v2100, 0
    %v2141 = vsel %vm213, %v2101, 0
    %v2144 = vsel %vm213, %v2102, 0
    %v2147 = vsel %vm213, %v2103, 0
    %v2150 = vsel %vm213, %v2104, 0
    %v2153 = vsel %vm213, %v2105, 0
    %v2156 = vsel %vm213, %v2106, 0
    %v2159 = vsel %vm213, %v2107, 0
    %v2162 = vsel %vm213, %v2108, 0
    %v2165 = vsel %vm213, %v2109, 0
    %v2168 = vsel %vm213, %v2110, 0
    %v2171 = vsel %vm213, %v2111, 0
    %v2174 = vsel %vm213, %v2112, 0
    %v2177 = vsel %vm213, %v2113, 0
    %v2180 = vsel %vm213, %v2114, 0
    %v2183 = vsel %vm213, %v2115, 0
    %v2186 = vsel %vm213, %v2116, 0
    %v2189 = vsel %vm213, %v2117, 0
    %v2192 = vsel %vm213, %v2118, 0
    %v2195 = vsel %vm213, %v2119, 0
    %v2198 = vsel %vm213, %v2120, 0
    %v2201 = vsel %vm213, %v2121, 0
    %v2204 = vsel %vm213, %v2122, 0
    %v2207 = vsel %vm213, %v2123, 0
    %v2210 = vsel %vm213, %v2124, 0
    %v2213 = vsel %vm213, %v2125, 0
    %v2216 = vsel %vm213, %v2126, 0
    %v2219 = vsel %vm213, %v2127, 0
    %v2222 = vsel %vm213, %v2128, 0
    %v2225 = vsel %vm213, %v2129, 0
    %v2228 = vsel %vm213, %v2130, 0
    %v2231 = vsel %vm213, %v2131, 0
    %2233 = vmatpush.bf16.xpose.msra.mxu0 %v2159
    %2234 = vmatpush.bf16.xpose.msra.mxu0 %v2156
    %2235 = vmatpush.bf16.xpose.msra.mxu0 %v2153
    %2236 = vmatpush.bf16.xpose.msra.mxu0 %v2150
    %2237 = vmatpush.bf16.xpose.msra.mxu0 %v2147
    %2238 = vmatpush.bf16.xpose.msra.mxu0 %v2144
    %2239 = vmatpush.bf16.xpose.msra.mxu0 %v2141
    %2240 = vmatpush.bf16.xpose.msra.mxu0 %v2138
    %2241 = vmatmul.bf16.gmra.mxu0 %v2135
    %v2242 = vpop.f32.mrf.mxu0
    %v2243 = vadd.f32 0.0, %v2242
    %v2244 = vpop.f32.mrf.mxu0
    %2245 = vdwg.mxu0
    %2246 = vmatpush.bf16.xpose.msra.mxu0 %v2183
    %2247 = vmatpush.bf16.xpose.msra.mxu0 %v2180
    %2248 = vmatpush.bf16.xpose.msra.mxu0 %v2177
    %2249 = vmatpush.bf16.xpose.msra.mxu0 %v2174
    %2250 = vmatpush.bf16.xpose.msra.mxu0 %v2171
    %2251 = vmatpush.bf16.xpose.msra.mxu0 %v2168
    %2252 = vmatpush.bf16.xpose.msra.mxu0 %v2165
    %2253 = vmatpush.bf16.xpose.msra.mxu0 %v2162
    %2254 = vmatmul.bf16.gmra.mxu0 %v2135
    %v2255 = vpop.f32.mrf.mxu0
    %v2256 = vadd.f32 0.0, %v2255
    %v2257 = vpop.f32.mrf.mxu0
    %2258 = vdwg.mxu0
    %2259 = vmatpush.bf16.xpose.msra.mxu0 %v2207
    %2260 = vmatpush.bf16.xpose.msra.mxu0 %v2204
    %2261 = vmatpush.bf16.xpose.msra.mxu0 %v2201
    %2262 = vmatpush.bf16.xpose.msra.mxu0 %v2198
    %2263 = vmatpush.bf16.xpose.msra.mxu0 %v2195
    %2264 = vmatpush.bf16.xpose.msra.mxu0 %v2192
    %2265 = vmatpush.bf16.xpose.msra.mxu0 %v2189
    %2266 = vmatpush.bf16.xpose.msra.mxu0 %v2186
    %2267 = vmatmul.bf16.gmra.mxu0 %v2135
    %v2268 = vpop.f32.mrf.mxu0
    %v2269 = vadd.f32 0.0, %v2268
    %v2270 = vpop.f32.mrf.mxu0
    %2271 = vdwg.mxu0
    %2272 = vmatpush.bf16.xpose.msra.mxu0 %v2231
    %2273 = vmatpush.bf16.xpose.msra.mxu0 %v2228
    %2274 = vmatpush.bf16.xpose.msra.mxu0 %v2225
    %2275 = vmatpush.bf16.xpose.msra.mxu0 %v2222
    %2276 = vmatpush.bf16.xpose.msra.mxu0 %v2219
    %2277 = vmatpush.bf16.xpose.msra.mxu0 %v2216
    %2278 = vmatpush.bf16.xpose.msra.mxu0 %v2213
    %2279 = vmatpush.bf16.xpose.msra.mxu0 %v2210
    %2280 = vmatmul.bf16.gmra.mxu0 %v2135
    %v2281 = vpop.f32.mrf.mxu0
    %v2282 = vadd.f32 0.0, %v2281
    %v2283 = vpop.f32.mrf.mxu0
    %2284 = vdwg.mxu0
    %v2285 = vadd.f32 %v2032, %v2243
    %v2286 = vadd.f32 %v2033, %v2256
    %v2287 = vadd.f32 %v2034, %v2269
    %v2288 = vadd.f32 %v2035, %v2282
    %v2289 = vadd.f32 %v2285, %v2286
    %v2290 = vadd.f32 %v2289, %v2287
    %v2291 = vadd.f32 %v2290, %v2288
    %2292 = vadd.xlane.f32.xlu0 %v2291
    %v2293 = vpop.xlane.xlu0 %2292
    %v2294 = vmul.f32 %v2285, %v2285
    %v2295 = vmul.f32 %v2286, %v2286
    %v2296 = vmul.f32 %v2287, %v2287
    %v2297 = vmul.f32 %v2288, %v2288
    %v2298 = vadd.f32 %v2294, %v2295
    %v2299 = vadd.f32 %v2298, %v2296
    %v2300 = vadd.f32 %v2299, %v2297
    %2301 = vadd.xlane.f32.xlu0 %v2300
    %v2302 = vpop.xlane.xlu0 %2301
    %v2303 = vmul.f32 %v2293, 0.001953125
    %v2304 = vmul.f32 %v2302, 0.001953125
    %v2305 = vmul.f32 %v2303, %v2303
    %v2306 = vsub.f32 %v2304, %v2305
    %v2307 = vadd.f32 %v2306, 1e-05
    %v2308 = vrsqrt.pop %v2307
    %v2309 = vmul.f32 %v2308, %v2307
    %v2310 = vmul.f32 %v2309, %v2308
    %v2311 = vmul.f32 0.5, %v2310
    %v2312 = vsub.f32 1.5, %v2311
    %v2313 = vmul.f32 %v2308, %v2312
    %vm2314 = vweird.f32 %v2307
    %vm2315 = vweird.f32 %v2308
    %vm2316 = vmor %vm2314, %vm2315
    %v2317 = vsel %vm2316, %v2308, %v2313
    %v2318 = vld [vmem:[%s2] sm:$0xff]
    %v2319 = vmul.f32 %v2317, %v2318
    %v2320 = vld [vmem:[%s3] sm:$0xff]
    %v2321 = vmul.f32 %v2303, %v2319
    %v2322 = vsub.f32 %v2320, %v2321
    %2324 = vset.pattern.permute.xlu0 0
    %2325 = vperm.xlu0 %2324, %v2319
    %v2326 = vpop.permute.xlu0 %2325
    %v2328 = vmul.f32 %v2285, %v2326
    %v2329 = vmul.f32 %v2286, %v2326
    %v2330 = vmul.f32 %v2287, %v2326
    %v2331 = vmul.f32 %v2288, %v2326
    %2333 = vset.pattern.permute.xlu0 0
    %2334 = vperm.xlu0 %2333, %v2322
    %v2335 = vpop.permute.xlu0 %2334
    %v2337 = vadd.f32 %v2328, %v2335
    %v2338 = vadd.f32 %v2329, %v2335
    %v2339 = vadd.f32 %v2330, %v2335
    %v2340 = vadd.f32 %v2331, %v2335
    %2341 = vst [vmem:[#allocation2] sm:$0xff] %v2337
    %2342 = vst [vmem:[#allocation2 + $0x8] sm:$0xff] %v2338
    %s2343 = scalar_lea.vmem [#allocation2], 16
    %2344 = vst [vmem:[%s2343] sm:$0xff] %v2339
    %2345 = vst [vmem:[%s2343 + $0x8] sm:$0xff] %v2340
    // Predicated region
    $region18: #{tpu_custom_call.1} parent=1 // pred_check
      _
    $region19: #{tpu_custom_call.1} parent=1 // pred_check_branch
      %2347 = sbr.rel (0) target = $region21
    $region20: #{tpu_custom_call.1} parent=1 // pred_region
      %2349 = vsyncadd [#allocation3], 0
      %s2350 = sshll.u32 [#allocation2], 4
      %s2351 = int_to_ptr.vmem [resolvable:$true] %s2350
      %s2352 = sshll.u32 %s4, 4
      %s2353 = int_to_ptr.hbm [resolvable:$true] %s2352
      %2358 = dma.vmem_to_hbm [thread:$0]  %s2351, 512, %s2353, [#allocation3], 256, 256, 16
    $region21: #{tpu_custom_call.1} parent=1 // pred_fallthru
      _
    // Predicated region
    $region22: #{tpu_custom_call.1} parent=1 // pred_check
      _
    $region23: #{tpu_custom_call.1} parent=1 // pred_check_branch
      %2360 = sbr.rel (0) target = $region25
    $region24: #{tpu_custom_call.1} parent=1 // pred_region
      %2362 = dma.done [#allocation3], 512
    $region25: #{tpu_custom_call.1} parent=1 // pred_fallthru
      _
    %2363 = vsyncpa [#allocation3], 1

</llo_original>
